<compile_context>
chip_gen: v7x
topology: tpu7x:2x2x1
jax: 0.10.0
libtpu: 0.0.40
codegen_flags: <defaults>
</compile_context>

<pallas_src>
import jax
import jax.numpy as jnp
from jax import lax
from jax.experimental import pallas as pl
from jax.experimental.pallas import tpu as pltpu

# ----- Config (module defaults) -------------------------------------------------
STATE_DIM = 32          # state_input_dim
HIDDEN_DIM = 64         # hidden_dim
NUM_ACTIONS = 16        # num_actions
EMB_DIM = 32            # action_embedding_dim
SEQ_LEN = 8             # sequence length T
BATCH = 2               # batch size B

B_PAD = 8               # batch padded to one full sublane group
HP = 128                # per-gate / hidden lane padding (one full vreg lane block)
G4 = 4 * HP             # padded gate width (512)


# ----- Pallas kernel -------------------------------------------------------------
def dual_lstm_kernel(xflat_ref, act_ref, wlstm_ref, wfuse_ref, bias_ref,
                     out_ref, xg_ref):
    D, A, T = STATE_DIM, NUM_ACTIONS, SEQ_LEN

    # --- state LSTM: fused input projection for ALL time steps --------------------
    # (T*8, D) @ (D, 4*HP) + (b_ih + b_hh), staged to VMEM scratch (T*8, 4*HP).
    xg = jnp.dot(xflat_ref[...], wlstm_ref[0:D, :],
                 preferred_element_type=jnp.float32) + bias_ref[:, 0:G4]
    xg_ref[...] = xg

    whh = wlstm_ref[D:D + HP, :]                                 # (HP, 4*HP)
    h = jnp.zeros((B_PAD, HP), jnp.float32)
    c = jnp.zeros((B_PAD, HP), jnp.float32)
    # T is small & static -> fully unrolled recurrence (pure MXU-latency chain).
    for t in range(T):
        gates = (xg_ref[t * B_PAD:(t + 1) * B_PAD, :]            # aligned (8, 512) tile
                 + jnp.dot(h, whh, preferred_element_type=jnp.float32))
        sig = jax.nn.sigmoid(gates[:, 0:3 * HP])                 # gates (i, f, o)
        g_g = jnp.tanh(gates[:, 3 * HP:4 * HP])                  # gate g
        i_g = sig[:, 0:HP]
        f_g = sig[:, HP:2 * HP]
        o_g = sig[:, 2 * HP:3 * HP]
        c = f_g * c + i_g * g_g
        h = o_g * jnp.tanh(c)
    state_out = h                    # (8, HP); lanes >= HIDDEN_DIM stay exactly 0

    # --- action path: argmax(last one-hot action) -> one-hot ----------------------
    # NOTE: float-equality argmax is exact here because action_seq is exact one-hot.
    a = act_ref[...]                                             # (8, A)
    col = lax.broadcasted_iota(jnp.int32, (B_PAD, A), 1).astype(jnp.float32)
    row_max = jnp.max(a, axis=1, keepdims=True)
    cand = jnp.where(a == row_max, col, jnp.float32(A))
    first_idx = jnp.min(cand, axis=1, keepdims=True)             # first max == torch.argmax
    onehot = (col == first_idx).astype(jnp.float32)              # (8, A)

    # --- fusion MLP (packed weight slab; embedding table folded into fc1) ---------
    z1 = (jnp.dot(state_out, wfuse_ref[0:HP, :], preferred_element_type=jnp.float32)
          + jnp.dot(onehot, wfuse_ref[HP:HP + A, :], preferred_element_type=jnp.float32)
          + bias_ref[:, G4:G4 + HP])
    fused = jnp.tanh(z1)                                         # (8, HP)
    z2 = (jnp.dot(fused, wfuse_ref[HP + A:HP + A + HP, :],
                  preferred_element_type=jnp.float32)
          + bias_ref[:, G4 + HP:G4 + 2 * HP])
    out_ref[...] = jnp.tanh(z2)                                  # (8, HP) unmasked store


# ----- Wrapper --------------------------------------------------------------------
def dual_lstm_forward(state_seq, action_seq, packed):
    """packed = (wlstm, wfuse, biases) from pack_params()."""
    wlstm, wfuse, biases = packed
    B, T, D = state_seq.shape
    # Time-major slab, batch zero-padded to 8 sublanes.
    x_tm = jnp.transpose(state_seq, (1, 0, 2))                   # (T, B, D)
    x_tm = jnp.pad(x_tm, ((0, 0), (0, B_PAD - B), (0, 0)))
    x_flat = x_tm.reshape(T * B_PAD, D)
    act_last = jnp.pad(action_seq[:, -1, :], ((0, B_PAD - B), (0, 0)))

    vmem = pl.BlockSpec(memory_space=pltpu.MemorySpace.VMEM)
    out = pl.pallas_call(
        dual_lstm_kernel,
        out_shape=jax.ShapeDtypeStruct((B_PAD, HP), jnp.float32),
        in_specs=[vmem] * 5,
        out_specs=vmem,
        scratch_shapes=[pltpu.VMEM((T * B_PAD, G4), jnp.float32)],
    )(x_flat, act_last, wlstm, wfuse, biases)
    return out[:B, :HIDDEN_DIM]


# ----- Deterministic PyTorch-layout parameter init --------------------------------
def orthogonal(key, rows, cols):
    """Semi-orthogonal (rows, cols) matrix with sign correction."""
    big, small = max(rows, cols), min(rows, cols)
    a = jax.random.normal(key, (big, small), dtype=jnp.float32)
    q, r = jnp.linalg.qr(a)
    q = q * jnp.sign(jnp.diagonal(r))[None, :]
    if rows < cols:
        q = q.T
    return q.astype(jnp.float32)


def make_torch_layout_params(key):
    """Parameters in native PyTorch layouts (nn.LSTM / nn.Embedding / nn.Linear)."""
    ks = jax.random.split(key, 9)
    H, D, A, E = HIDDEN_DIM, STATE_DIM, NUM_ACTIONS, EMB_DIM
    return dict(
        w_ih=orthogonal(ks[0], 4 * H, D),                       # LSTM weight_ih_l0 (4H, D)
        w_hh=orthogonal(ks[1], 4 * H, H),                       # LSTM weight_hh_l0 (4H, H)
        b_ih=0.1 * jax.random.normal(ks[2], (4 * H,), jnp.float32),
        b_hh=0.1 * jax.random.normal(ks[3], (4 * H,), jnp.float32),
        emb=jax.random.normal(ks[4], (A, E), jnp.float32),      # Embedding (A, E)
        w1=orthogonal(ks[5], H, H + E),                         # fc1.weight (H, H+E)
        b1=0.1 * jax.random.normal(ks[6], (H,), jnp.float32),
        w2=orthogonal(ks[7], H, H),                             # fc2.weight (H, H)
        b2=0.1 * jax.random.normal(ks[8], (H,), jnp.float32),
    )


def pack_params(p):
    """Convert PyTorch-layout weights into the kernel's packed/padded layout."""
    H, D, A, E = HIDDEN_DIM, STATE_DIM, NUM_ACTIONS, EMB_DIM
    # PyTorch gate order along 4H is (i, f, g, o); kernel uses (i, f, o, g), each gate
    # zero-padded from H=64 to HP=128 lanes.
    perm = (0, 1, 3, 2)                    # kernel gate block k <- torch gate perm[k]

    def lstm_cols(w_t):                    # w_t: (in, 4H) -> (in, 4*HP) kernel layout
        out = jnp.zeros((w_t.shape[0], G4), jnp.float32)
        for k in range(4):
            src = perm[k]
            out = out.at[:, k * HP:k * HP + H].set(w_t[:, src * H:(src + 1) * H])
        return out

    wih_p = lstm_cols(p["w_ih"].T)                                        # (D, 4*HP)
    whh_p = jnp.zeros((HP, G4), jnp.float32).at[0:H, :].set(lstm_cols(p["w_hh"].T))
    blstm_p = lstm_cols((p["b_ih"] + p["b_hh"])[None, :])                 # (1, 4*HP)
    wlstm = jnp.concatenate([wih_p, whh_p], axis=0)                       # (D+HP, 4*HP)

    w1t = p["w1"].T                                                       # (H+E, H)
    w1s_p = jnp.zeros((HP, HP), jnp.float32).at[0:H, 0:H].set(w1t[0:H, :])
    emb_w1a = p["emb"] @ w1t[H:H + E, :]                                  # fold emb into fc1
    emb_w1a_p = jnp.zeros((A, HP), jnp.float32).at[:, 0:H].set(emb_w1a)
    w2_p = jnp.zeros((HP, HP), jnp.float32).at[0:H, 0:H].set(p["w2"].T)
    wfuse = jnp.concatenate([w1s_p, emb_w1a_p, w2_p], axis=0)             # (2*HP+A, HP)

    b1_p = jnp.zeros((1, HP), jnp.float32).at[0, 0:H].set(p["b1"])
    b2_p = jnp.zeros((1, HP), jnp.float32).at[0, 0:H].set(p["b2"])
    biases = jnp.concatenate([blstm_p, b1_p, b2_p], axis=1)               # (1, 6*HP)
    return (wlstm, wfuse, biases)


# ----- Pure-JAX reference (uses native PyTorch weight layouts) ---------------------
def reference_forward(state_seq, action_seq, p):
    H = HIDDEN_DIM
    B, T, _ = state_seq.shape
    h = jnp.zeros((B, H), jnp.float32)
    c = jnp.zeros((B, H), jnp.float32)
    for t in range(T):
        gates = (state_seq[:, t, :] @ p["w_ih"].T + p["b_ih"]
                 + h @ p["w_hh"].T + p["b_hh"])
        i_g = jax.nn.sigmoid(gates[:, 0:H])
        f_g = jax.nn.sigmoid(gates[:, H:2 * H])
        g_g = jnp.tanh(gates[:, 2 * H:3 * H])
        o_g = jax.nn.sigmoid(gates[:, 3 * H:4 * H])
        c = f_g * c + i_g * g_g
        h = o_g * jnp.tanh(c)
    ids = jnp.argmax(action_seq[:, -1, :], axis=-1)
    a_emb = jnp.take(p["emb"], ids, axis=0)
    combined = jnp.concatenate([h, a_emb], axis=1)
    fused = jnp.tanh(combined @ p["w1"].T + p["b1"])
    return jnp.tanh(fused @ p["w2"].T + p["b2"])


if __name__ == "__main__":
    key = jax.random.PRNGKey(0)
    k_state, k_act, k_params = jax.random.split(key, 3)

    # Inputs
    state_seq = jax.random.normal(k_state, (BATCH, SEQ_LEN, STATE_DIM), dtype=jnp.float32)
    act_ids = jax.random.randint(k_act, (BATCH, SEQ_LEN), 0, NUM_ACTIONS)
    action_seq = jax.nn.one_hot(act_ids, NUM_ACTIONS, dtype=jnp.float32)

    # Parameters: PyTorch-native layout -> packed kernel layout
    torch_params = make_torch_layout_params(k_params)
    packed = pack_params(torch_params)

    fused_out = dual_lstm_forward(state_seq, action_seq, packed)
    jax.block_until_ready(fused_out)

    ref_out = reference_forward(state_seq, action_seq, torch_params)

    assert fused_out.shape == (BATCH, HIDDEN_DIM)
    assert bool(jnp.all(jnp.isfinite(fused_out)))
    assert jnp.allclose(fused_out, ref_out, atol=2e-3, rtol=2e-3)

    print("KERNEL_OK")
</pallas_src>

<mosaic_0001>
module attributes {stable_mosaic.version = 11 : i64} {
  func.func @dual_lstm_kernel(%arg0: memref<64x32xf32, #tpu.memory_space<vmem>>, %arg1: memref<8x16xf32, #tpu.memory_space<vmem>>, %arg2: memref<160x512xf32, #tpu.memory_space<vmem>>, %arg3: memref<272x128xf32, #tpu.memory_space<vmem>>, %arg4: memref<1x768xf32, #tpu.memory_space<vmem>>, %arg5: memref<8x128xf32, #tpu.memory_space<vmem>>, %arg6: memref<64x512xf32, #tpu.memory_space<vmem>>) attributes {dimension_semantics = [], scalar_prefetch = 0 : i64, scratch_operands = 1 : i64, tpu.core_type = #tpu.core_type<tc>} {
    %c0 = arith.constant 0 : index
    %c0_0 = arith.constant 0 : index
    %0 = vector.load %arg0[%c0, %c0_0] : memref<64x32xf32, #tpu.memory_space<vmem>>, vector<64x32xf32>
    %c0_1 = arith.constant 0 : index
    %c0_2 = arith.constant 0 : index
    %1 = vector.load %arg2[%c0_1, %c0_2] : memref<160x512xf32, #tpu.memory_space<vmem>>, vector<32x512xf32>
    %cst = arith.constant dense<0.000000e+00> : vector<64x512xf32>
    %2 = tpu.matmul %0, %1, %cst {dimension_numbers = #tpu.dot_dimension_numbers<[1], [0], [0], [1], [0, 0, 1, 1], [], []>} : vector<64x32xf32>, vector<32x512xf32>, vector<64x512xf32> -> vector<64x512xf32>
    %c0_3 = arith.constant 0 : index
    %c0_4 = arith.constant 0 : index
    %3 = vector.load %arg4[%c0_3, %c0_4] : memref<1x768xf32, #tpu.memory_space<vmem>>, vector<1x512xf32>
    %4 = vector.broadcast %3 : vector<1x512xf32> to vector<64x512xf32>
    %5 = arith.addf %2, %4 : vector<64x512xf32>
    %c0_5 = arith.constant 0 : index
    %c0_6 = arith.constant 0 : index
    %6 = vector.load %arg6[%c0_5, %c0_6] : memref<64x512xf32, #tpu.memory_space<vmem>>, vector<64x512xf32>
    tpu.vector_store %arg6[%c0_5, %c0_6], %5 {strides = array<i32>} : memref<64x512xf32, #tpu.memory_space<vmem>>, vector<64x512xf32>,
    %c32 = arith.constant 32 : index
    %c0_7 = arith.constant 0 : index
    %7 = vector.load %arg2[%c32, %c0_7] : memref<160x512xf32, #tpu.memory_space<vmem>>, vector<128x512xf32>
    %cst_8 = arith.constant 0.000000e+00 : f32
    %8 = vector.broadcast %cst_8 : f32 to vector<8x128xf32>
    %cst_9 = arith.constant 0.000000e+00 : f32
    %9 = vector.broadcast %cst_9 : f32 to vector<8x128xf32>
    %c0_10 = arith.constant 0 : index
    %c0_11 = arith.constant 0 : index
    %10 = vector.load %arg6[%c0_10, %c0_11] : memref<64x512xf32, #tpu.memory_space<vmem>>, vector<8x512xf32>
    %cst_12 = arith.constant dense<0.000000e+00> : vector<8x512xf32>
    %11 = tpu.matmul %8, %7, %cst_12 {dimension_numbers = #tpu.dot_dimension_numbers<[1], [0], [0], [1], [0, 0, 1, 1], [], []>} : vector<8x128xf32>, vector<128x512xf32>, vector<8x512xf32> -> vector<8x512xf32>
    %12 = arith.addf %10, %11 : vector<8x512xf32>
    %13 = vector.extract_strided_slice %12 {offsets = [0, 0], sizes = [8, 384], strides = [1, 1]} : vector<8x512xf32> to vector<8x384xf32>
    %14 = arith.negf %13 : vector<8x384xf32>
    %15 = math.exp %14 : vector<8x384xf32>
    %cst_13 = arith.constant 1.000000e+00 : f32
    %16 = vector.broadcast %cst_13 : f32 to vector<8x384xf32>
    %17 = arith.addf %16, %15 : vector<8x384xf32>
    %18 = arith.divf %16, %17 : vector<8x384xf32>
    %19 = vector.extract_strided_slice %12 {offsets = [0, 384], sizes = [8, 128], strides = [1, 1]} : vector<8x512xf32> to vector<8x128xf32>
    %20 = math.tanh %19 : vector<8x128xf32>
    %21 = vector.extract_strided_slice %18 {offsets = [0, 0], sizes = [8, 128], strides = [1, 1]} : vector<8x384xf32> to vector<8x128xf32>
    %22 = vector.extract_strided_slice %18 {offsets = [0, 128], sizes = [8, 128], strides = [1, 1]} : vector<8x384xf32> to vector<8x128xf32>
    %23 = vector.extract_strided_slice %18 {offsets = [0, 256], sizes = [8, 128], strides = [1, 1]} : vector<8x384xf32> to vector<8x128xf32>
    %24 = arith.mulf %22, %9 : vector<8x128xf32>
    %25 = arith.mulf %21, %20 : vector<8x128xf32>
    %26 = arith.addf %24, %25 : vector<8x128xf32>
    %27 = math.tanh %26 : vector<8x128xf32>
    %28 = arith.mulf %23, %27 : vector<8x128xf32>
    %c8 = arith.constant 8 : index
    %c0_14 = arith.constant 0 : index
    %29 = vector.load %arg6[%c8, %c0_14] : memref<64x512xf32, #tpu.memory_space<vmem>>, vector<8x512xf32>
    %cst_15 = arith.constant dense<0.000000e+00> : vector<8x512xf32>
    %30 = tpu.matmul %28, %7, %cst_15 {dimension_numbers = #tpu.dot_dimension_numbers<[1], [0], [0], [1], [0, 0, 1, 1], [], []>} : vector<8x128xf32>, vector<128x512xf32>, vector<8x512xf32> -> vector<8x512xf32>
    %31 = arith.addf %29, %30 : vector<8x512xf32>
    %32 = vector.extract_strided_slice %31 {offsets = [0, 0], sizes = [8, 384], strides = [1, 1]} : vector<8x512xf32> to vector<8x384xf32>
    %33 = arith.negf %32 : vector<8x384xf32>
    %34 = math.exp %33 : vector<8x384xf32>
    %cst_16 = arith.constant 1.000000e+00 : f32
    %35 = vector.broadcast %cst_16 : f32 to vector<8x384xf32>
    %36 = arith.addf %35, %34 : vector<8x384xf32>
    %37 = arith.divf %35, %36 : vector<8x384xf32>
    %38 = vector.extract_strided_slice %31 {offsets = [0, 384], sizes = [8, 128], strides = [1, 1]} : vector<8x512xf32> to vector<8x128xf32>
    %39 = math.tanh %38 : vector<8x128xf32>
    %40 = vector.extract_strided_slice %37 {offsets = [0, 0], sizes = [8, 128], strides = [1, 1]} : vector<8x384xf32> to vector<8x128xf32>
    %41 = vector.extract_strided_slice %37 {offsets = [0, 128], sizes = [8, 128], strides = [1, 1]} : vector<8x384xf32> to vector<8x128xf32>
    %42 = vector.extract_strided_slice %37 {offsets = [0, 256], sizes = [8, 128], strides = [1, 1]} : vector<8x384xf32> to vector<8x128xf32>
    %43 = arith.mulf %41, %26 : vector<8x128xf32>
    %44 = arith.mulf %40, %39 : vector<8x128xf32>
    %45 = arith.addf %43, %44 : vector<8x128xf32>
    %46 = math.tanh %45 : vector<8x128xf32>
    %47 = arith.mulf %42, %46 : vector<8x128xf32>
    %c16 = arith.constant 16 : index
    %c0_17 = arith.constant 0 : index
    %48 = vector.load %arg6[%c16, %c0_17] : memref<64x512xf32, #tpu.memory_space<vmem>>, vector<8x512xf32>
    %cst_18 = arith.constant dense<0.000000e+00> : vector<8x512xf32>
    %49 = tpu.matmul %47, %7, %cst_18 {dimension_numbers = #tpu.dot_dimension_numbers<[1], [0], [0], [1], [0, 0, 1, 1], [], []>} : vector<8x128xf32>, vector<128x512xf32>, vector<8x512xf32> -> vector<8x512xf32>
    %50 = arith.addf %48, %49 : vector<8x512xf32>
    %51 = vector.extract_strided_slice %50 {offsets = [0, 0], sizes = [8, 384], strides = [1, 1]} : vector<8x512xf32> to vector<8x384xf32>
    %52 = arith.negf %51 : vector<8x384xf32>
    %53 = math.exp %52 : vector<8x384xf32>
    %cst_19 = arith.constant 1.000000e+00 : f32
    %54 = vector.broadcast %cst_19 : f32 to vector<8x384xf32>
    %55 = arith.addf %54, %53 : vector<8x384xf32>
    %56 = arith.divf %54, %55 : vector<8x384xf32>
    %57 = vector.extract_strided_slice %50 {offsets = [0, 384], sizes = [8, 128], strides = [1, 1]} : vector<8x512xf32> to vector<8x128xf32>
    %58 = math.tanh %57 : vector<8x128xf32>
    %59 = vector.extract_strided_slice %56 {offsets = [0, 0], sizes = [8, 128], strides = [1, 1]} : vector<8x384xf32> to vector<8x128xf32>
    %60 = vector.extract_strided_slice %56 {offsets = [0, 128], sizes = [8, 128], strides = [1, 1]} : vector<8x384xf32> to vector<8x128xf32>
    %61 = vector.extract_strided_slice %56 {offsets = [0, 256], sizes = [8, 128], strides = [1, 1]} : vector<8x384xf32> to vector<8x128xf32>
    %62 = arith.mulf %60, %45 : vector<8x128xf32>
    %63 = arith.mulf %59, %58 : vector<8x128xf32>
    %64 = arith.addf %62, %63 : vector<8x128xf32>
    %65 = math.tanh %64 : vector<8x128xf32>
    %66 = arith.mulf %61, %65 : vector<8x128xf32>
    %c24 = arith.constant 24 : index
    %c0_20 = arith.constant 0 : index
    %67 = vector.load %arg6[%c24, %c0_20] : memref<64x512xf32, #tpu.memory_space<vmem>>, vector<8x512xf32>
    %cst_21 = arith.constant dense<0.000000e+00> : vector<8x512xf32>
    %68 = tpu.matmul %66, %7, %cst_21 {dimension_numbers = #tpu.dot_dimension_numbers<[1], [0], [0], [1], [0, 0, 1, 1], [], []>} : vector<8x128xf32>, vector<128x512xf32>, vector<8x512xf32> -> vector<8x512xf32>
    %69 = arith.addf %67, %68 : vector<8x512xf32>
    %70 = vector.extract_strided_slice %69 {offsets = [0, 0], sizes = [8, 384], strides = [1, 1]} : vector<8x512xf32> to vector<8x384xf32>
    %71 = arith.negf %70 : vector<8x384xf32>
    %72 = math.exp %71 : vector<8x384xf32>
    %cst_22 = arith.constant 1.000000e+00 : f32
    %73 = vector.broadcast %cst_22 : f32 to vector<8x384xf32>
    %74 = arith.addf %73, %72 : vector<8x384xf32>
    %75 = arith.divf %73, %74 : vector<8x384xf32>
    %76 = vector.extract_strided_slice %69 {offsets = [0, 384], sizes = [8, 128], strides = [1, 1]} : vector<8x512xf32> to vector<8x128xf32>
    %77 = math.tanh %76 : vector<8x128xf32>
    %78 = vector.extract_strided_slice %75 {offsets = [0, 0], sizes = [8, 128], strides = [1, 1]} : vector<8x384xf32> to vector<8x128xf32>
    %79 = vector.extract_strided_slice %75 {offsets = [0, 128], sizes = [8, 128], strides = [1, 1]} : vector<8x384xf32> to vector<8x128xf32>
    %80 = vector.extract_strided_slice %75 {offsets = [0, 256], sizes = [8, 128], strides = [1, 1]} : vector<8x384xf32> to vector<8x128xf32>
    %81 = arith.mulf %79, %64 : vector<8x128xf32>
    %82 = arith.mulf %78, %77 : vector<8x128xf32>
    %83 = arith.addf %81, %82 : vector<8x128xf32>
    %84 = math.tanh %83 : vector<8x128xf32>
    %85 = arith.mulf %80, %84 : vector<8x128xf32>
    %c32_23 = arith.constant 32 : index
    %c0_24 = arith.constant 0 : index
    %86 = vector.load %arg6[%c32_23, %c0_24] : memref<64x512xf32, #tpu.memory_space<vmem>>, vector<8x512xf32>
    %cst_25 = arith.constant dense<0.000000e+00> : vector<8x512xf32>
    %87 = tpu.matmul %85, %7, %cst_25 {dimension_numbers = #tpu.dot_dimension_numbers<[1], [0], [0], [1], [0, 0, 1, 1], [], []>} : vector<8x128xf32>, vector<128x512xf32>, vector<8x512xf32> -> vector<8x512xf32>
    %88 = arith.addf %86, %87 : vector<8x512xf32>
    %89 = vector.extract_strided_slice %88 {offsets = [0, 0], sizes = [8, 384], strides = [1, 1]} : vector<8x512xf32> to vector<8x384xf32>
    %90 = arith.negf %89 : vector<8x384xf32>
    %91 = math.exp %90 : vector<8x384xf32>
    %cst_26 = arith.constant 1.000000e+00 : f32
    %92 = vector.broadcast %cst_26 : f32 to vector<8x384xf32>
    %93 = arith.addf %92, %91 : vector<8x384xf32>
    %94 = arith.divf %92, %93 : vector<8x384xf32>
    %95 = vector.extract_strided_slice %88 {offsets = [0, 384], sizes = [8, 128], strides = [1, 1]} : vector<8x512xf32> to vector<8x128xf32>
    %96 = math.tanh %95 : vector<8x128xf32>
    %97 = vector.extract_strided_slice %94 {offsets = [0, 0], sizes = [8, 128], strides = [1, 1]} : vector<8x384xf32> to vector<8x128xf32>
    %98 = vector.extract_strided_slice %94 {offsets = [0, 128], sizes = [8, 128], strides = [1, 1]} : vector<8x384xf32> to vector<8x128xf32>
    %99 = vector.extract_strided_slice %94 {offsets = [0, 256], sizes = [8, 128], strides = [1, 1]} : vector<8x384xf32> to vector<8x128xf32>
    %100 = arith.mulf %98, %83 : vector<8x128xf32>
    %101 = arith.mulf %97, %96 : vector<8x128xf32>
    %102 = arith.addf %100, %101 : vector<8x128xf32>
    %103 = math.tanh %102 : vector<8x128xf32>
    %104 = arith.mulf %99, %103 : vector<8x128xf32>
    %c40 = arith.constant 40 : index
    %c0_27 = arith.constant 0 : index
    %105 = vector.load %arg6[%c40, %c0_27] : memref<64x512xf32, #tpu.memory_space<vmem>>, vector<8x512xf32>
    %cst_28 = arith.constant dense<0.000000e+00> : vector<8x512xf32>
    %106 = tpu.matmul %104, %7, %cst_28 {dimension_numbers = #tpu.dot_dimension_numbers<[1], [0], [0], [1], [0, 0, 1, 1], [], []>} : vector<8x128xf32>, vector<128x512xf32>, vector<8x512xf32> -> vector<8x512xf32>
    %107 = arith.addf %105, %106 : vector<8x512xf32>
    %108 = vector.extract_strided_slice %107 {offsets = [0, 0], sizes = [8, 384], strides = [1, 1]} : vector<8x512xf32> to vector<8x384xf32>
    %109 = arith.negf %108 : vector<8x384xf32>
    %110 = math.exp %109 : vector<8x384xf32>
    %cst_29 = arith.constant 1.000000e+00 : f32
    %111 = vector.broadcast %cst_29 : f32 to vector<8x384xf32>
    %112 = arith.addf %111, %110 : vector<8x384xf32>
    %113 = arith.divf %111, %112 : vector<8x384xf32>
    %114 = vector.extract_strided_slice %107 {offsets = [0, 384], sizes = [8, 128], strides = [1, 1]} : vector<8x512xf32> to vector<8x128xf32>
    %115 = math.tanh %114 : vector<8x128xf32>
    %116 = vector.extract_strided_slice %113 {offsets = [0, 0], sizes = [8, 128], strides = [1, 1]} : vector<8x384xf32> to vector<8x128xf32>
    %117 = vector.extract_strided_slice %113 {offsets = [0, 128], sizes = [8, 128], strides = [1, 1]} : vector<8x384xf32> to vector<8x128xf32>
    %118 = vector.extract_strided_slice %113 {offsets = [0, 256], sizes = [8, 128], strides = [1, 1]} : vector<8x384xf32> to vector<8x128xf32>
    %119 = arith.mulf %117, %102 : vector<8x128xf32>
    %120 = arith.mulf %116, %115 : vector<8x128xf32>
    %121 = arith.addf %119, %120 : vector<8x128xf32>
    %122 = math.tanh %121 : vector<8x128xf32>
    %123 = arith.mulf %118, %122 : vector<8x128xf32>
    %c48 = arith.constant 48 : index
    %c0_30 = arith.constant 0 : index
    %124 = vector.load %arg6[%c48, %c0_30] : memref<64x512xf32, #tpu.memory_space<vmem>>, vector<8x512xf32>
    %cst_31 = arith.constant dense<0.000000e+00> : vector<8x512xf32>
    %125 = tpu.matmul %123, %7, %cst_31 {dimension_numbers = #tpu.dot_dimension_numbers<[1], [0], [0], [1], [0, 0, 1, 1], [], []>} : vector<8x128xf32>, vector<128x512xf32>, vector<8x512xf32> -> vector<8x512xf32>
    %126 = arith.addf %124, %125 : vector<8x512xf32>
    %127 = vector.extract_strided_slice %126 {offsets = [0, 0], sizes = [8, 384], strides = [1, 1]} : vector<8x512xf32> to vector<8x384xf32>
    %128 = arith.negf %127 : vector<8x384xf32>
    %129 = math.exp %128 : vector<8x384xf32>
    %cst_32 = arith.constant 1.000000e+00 : f32
    %130 = vector.broadcast %cst_32 : f32 to vector<8x384xf32>
    %131 = arith.addf %130, %129 : vector<8x384xf32>
    %132 = arith.divf %130, %131 : vector<8x384xf32>
    %133 = vector.extract_strided_slice %126 {offsets = [0, 384], sizes = [8, 128], strides = [1, 1]} : vector<8x512xf32> to vector<8x128xf32>
    %134 = math.tanh %133 : vector<8x128xf32>
    %135 = vector.extract_strided_slice %132 {offsets = [0, 0], sizes = [8, 128], strides = [1, 1]} : vector<8x384xf32> to vector<8x128xf32>
    %136 = vector.extract_strided_slice %132 {offsets = [0, 128], sizes = [8, 128], strides = [1, 1]} : vector<8x384xf32> to vector<8x128xf32>
    %137 = vector.extract_strided_slice %132 {offsets = [0, 256], sizes = [8, 128], strides = [1, 1]} : vector<8x384xf32> to vector<8x128xf32>
    %138 = arith.mulf %136, %121 : vector<8x128xf32>
    %139 = arith.mulf %135, %134 : vector<8x128xf32>
    %140 = arith.addf %138, %139 : vector<8x128xf32>
    %141 = math.tanh %140 : vector<8x128xf32>
    %142 = arith.mulf %137, %141 : vector<8x128xf32>
    %c56 = arith.constant 56 : index
    %c0_33 = arith.constant 0 : index
    %143 = vector.load %arg6[%c56, %c0_33] : memref<64x512xf32, #tpu.memory_space<vmem>>, vector<8x512xf32>
    %cst_34 = arith.constant dense<0.000000e+00> : vector<8x512xf32>
    %144 = tpu.matmul %142, %7, %cst_34 {dimension_numbers = #tpu.dot_dimension_numbers<[1], [0], [0], [1], [0, 0, 1, 1], [], []>} : vector<8x128xf32>, vector<128x512xf32>, vector<8x512xf32> -> vector<8x512xf32>
    %145 = arith.addf %143, %144 : vector<8x512xf32>
    %146 = vector.extract_strided_slice %145 {offsets = [0, 0], sizes = [8, 384], strides = [1, 1]} : vector<8x512xf32> to vector<8x384xf32>
    %147 = arith.negf %146 : vector<8x384xf32>
    %148 = math.exp %147 : vector<8x384xf32>
    %cst_35 = arith.constant 1.000000e+00 : f32
    %149 = vector.broadcast %cst_35 : f32 to vector<8x384xf32>
    %150 = arith.addf %149, %148 : vector<8x384xf32>
    %151 = arith.divf %149, %150 : vector<8x384xf32>
    %152 = vector.extract_strided_slice %145 {offsets = [0, 384], sizes = [8, 128], strides = [1, 1]} : vector<8x512xf32> to vector<8x128xf32>
    %153 = math.tanh %152 : vector<8x128xf32>
    %154 = vector.extract_strided_slice %151 {offsets = [0, 0], sizes = [8, 128], strides = [1, 1]} : vector<8x384xf32> to vector<8x128xf32>
    %155 = vector.extract_strided_slice %151 {offsets = [0, 128], sizes = [8, 128], strides = [1, 1]} : vector<8x384xf32> to vector<8x128xf32>
    %156 = vector.extract_strided_slice %151 {offsets = [0, 256], sizes = [8, 128], strides = [1, 1]} : vector<8x384xf32> to vector<8x128xf32>
    %157 = arith.mulf %155, %140 : vector<8x128xf32>
    %158 = arith.mulf %154, %153 : vector<8x128xf32>
    %159 = arith.addf %157, %158 : vector<8x128xf32>
    %160 = math.tanh %159 : vector<8x128xf32>
    %161 = arith.mulf %156, %160 : vector<8x128xf32>
    %c0_36 = arith.constant 0 : index
    %c0_37 = arith.constant 0 : index
    %162 = vector.load %arg1[%c0_36, %c0_37] : memref<8x16xf32, #tpu.memory_space<vmem>>, vector<8x16xf32>
    %163 = tpu.iota {dimensions = array<i32: 1>} : vector<8x16xi32>
    %164 = arith.sitofp %163 : vector<8x16xi32> to vector<8x16xf32>
    %cst_38 = arith.constant dense<0xFF800000> : vector<8xf32>
    %165 = vector.multi_reduction <maximumf>, %162, %cst_38 [1] : vector<8x16xf32> to vector<8xf32>
    %166 = vector.shape_cast %165 : vector<8xf32> to vector<8x1xf32>
    %167 = vector.broadcast %166 : vector<8x1xf32> to vector<8x16xf32>
    %168 = arith.cmpf oeq, %162, %167 : vector<8x16xf32>
    %cst_39 = arith.constant 1.600000e+01 : f32
    %169 = vector.broadcast %cst_39 : f32 to vector<8x16xf32>
    %170 = arith.select %168, %164, %169 : vector<8x16xi1>, vector<8x16xf32>
    %cst_40 = arith.constant dense<0x7F800000> : vector<8xf32>
    %171 = vector.multi_reduction <minimumf>, %170, %cst_40 [1] : vector<8x16xf32> to vector<8xf32>
    %172 = vector.shape_cast %171 : vector<8xf32> to vector<8x1xf32>
    %173 = vector.broadcast %172 : vector<8x1xf32> to vector<8x16xf32>
    %174 = arith.cmpf oeq, %164, %173 : vector<8x16xf32>
    %175 = arith.extui %174 : vector<8x16xi1> to vector<8x16xi32>
    %176 = arith.sitofp %175 : vector<8x16xi32> to vector<8x16xf32>
    %c0_41 = arith.constant 0 : index
    %c0_42 = arith.constant 0 : index
    %177 = vector.load %arg3[%c0_41, %c0_42] : memref<272x128xf32, #tpu.memory_space<vmem>>, vector<128x128xf32>
    %cst_43 = arith.constant dense<0.000000e+00> : vector<8x128xf32>
    %178 = tpu.matmul %161, %177, %cst_43 {dimension_numbers = #tpu.dot_dimension_numbers<[1], [0], [0], [1], [0, 0, 1, 1], [], []>} : vector<8x128xf32>, vector<128x128xf32>, vector<8x128xf32> -> vector<8x128xf32>
    %c128 = arith.constant 128 : index
    %c0_44 = arith.constant 0 : index
    %179 = vector.load %arg3[%c128, %c0_44] : memref<272x128xf32, #tpu.memory_space<vmem>>, vector<16x128xf32>
    %cst_45 = arith.constant dense<0.000000e+00> : vector<8x128xf32>
    %180 = tpu.matmul %176, %179, %cst_45 {dimension_numbers = #tpu.dot_dimension_numbers<[1], [0], [0], [1], [0, 0, 1, 1], [], []>} : vector<8x16xf32>, vector<16x128xf32>, vector<8x128xf32> -> vector<8x128xf32>
    %181 = arith.addf %178, %180 : vector<8x128xf32>
    %c0_46 = arith.constant 0 : index
    %c512 = arith.constant 512 : index
    %182 = vector.load %arg4[%c0_46, %c512] : memref<1x768xf32, #tpu.memory_space<vmem>>, vector<1x128xf32>
    %183 = vector.broadcast %182 : vector<1x128xf32> to vector<8x128xf32>
    %184 = arith.addf %181, %183 : vector<8x128xf32>
    %185 = math.tanh %184 : vector<8x128xf32>
    %c144 = arith.constant 144 : index
    %c0_47 = arith.constant 0 : index
    %186 = vector.load %arg3[%c144, %c0_47] : memref<272x128xf32, #tpu.memory_space<vmem>>, vector<128x128xf32>
    %cst_48 = arith.constant dense<0.000000e+00> : vector<8x128xf32>
    %187 = tpu.matmul %185, %186, %cst_48 {dimension_numbers = #tpu.dot_dimension_numbers<[1], [0], [0], [1], [0, 0, 1, 1], [], []>} : vector<8x128xf32>, vector<128x128xf32>, vector<8x128xf32> -> vector<8x128xf32>
    %c0_49 = arith.constant 0 : index
    %c640 = arith.constant 640 : index
    %188 = vector.load %arg4[%c0_49, %c640] : memref<1x768xf32, #tpu.memory_space<vmem>>, vector<1x128xf32>
    %189 = vector.broadcast %188 : vector<1x128xf32> to vector<8x128xf32>
    %190 = arith.addf %187, %189 : vector<8x128xf32>
    %191 = math.tanh %190 : vector<8x128xf32>
    %c0_50 = arith.constant 0 : index
    %c0_51 = arith.constant 0 : index
    %192 = vector.load %arg5[%c0_50, %c0_51] : memref<8x128xf32, #tpu.memory_space<vmem>>, vector<8x128xf32>
    tpu.vector_store %arg5[%c0_50, %c0_51], %191 {strides = array<i32>} : memref<8x128xf32, #tpu.memory_space<vmem>>, vector<8x128xf32>,
    return
  }
}

</mosaic_0001>

<llo_original>
// kernel: tpu_custom_call.1
$region0: #{tpu_custom_call.1}
  #allocation0 [shape = 'u32[]', space=smem, size = 0x4, offset = 0x4, fixed_abs, tag = 'smem constant byte address 0x4 - core index']
  #allocation1 [shape = 'u32[144,128]{1,0:T(1,128)}', space=vmem, size = 0x12000, scoped, tag = 'internal scratch']
  #allocation2 [shape = 'f32[64,512]{1,0:T(8,128)}', space=vmem, size = 0x20000, scoped, tag = 'scratch operand']
  %s0 = inlined_call_operand.vmem [shape: f32[64,32], index: 0, kind: input, shape index: {}]
  %s1 = inlined_call_operand.vmem [shape: f32[8,16], index: 1, kind: input, shape index: {}]
  %s2 = inlined_call_operand.hbm [shape: f32[160,512], index: 2, kind: input, shape index: {}]
  %s3 = inlined_call_operand.hbm [shape: f32[272,128], index: 3, kind: input, shape index: {}]
  %s4 = inlined_call_operand.vmem [shape: f32[1,768], index: 4, kind: input, shape index: {}]
  %s5 = inlined_call_operand.hbm [shape: f32[8,128], index: 5, kind: output, shape index: {}]
  %s6 = sld [smem:[#allocation0]]
  $region38: #{tpu_custom_call.1} parent=0
    _
  %s8 = ssub.s32 1, %s6
  %s9 = scalar_select 0, %s8, %s6
  $region1: #{tpu_custom_call.1} parent=0
    #allocation3 [shape = 'u8[327680]{0}', space=vmem, size = 0x50000, scoped, tag = 'input window, operand 2, single buffered']
    #allocation4 [shape = 's32[1]{0}', space=sflag, size = 0x4, scoped, tag = 'scoped memory for tpu_custom_call.1']
    #allocation5 [shape = 's32[1]{0}', space=sflag, size = 0x4, scoped, tag = 'scoped memory for tpu_custom_call.1']
    #allocation6 [shape = 'u8[139264]{0}', space=vmem, size = 0x22000, scoped, tag = 'input window, operand 3, single buffered']
    #allocation7 [shape = 's32[1]{0}', space=sflag, size = 0x4, scoped, tag = 'scoped memory for tpu_custom_call.1']
    #allocation8 [shape = 'u8[4096]{0}', space=vmem, size = 0x1000, scoped, tag = 'output window, operand 0, single buffered']
    %10 = vsyncpa [#allocation4], 0
    %11 = vsyncpa [#allocation7], 0
    %12 = vsyncpa [#allocation5], 0
    // Predicated region
    $region2: #{tpu_custom_call.1} parent=1 // pred_check
      _
    $region3: #{tpu_custom_call.1} parent=1 // pred_check_branch
      %14 = sbr.rel (0) target = $region5
    $region4: #{tpu_custom_call.1} parent=1 // pred_region
      _
    $region5: #{tpu_custom_call.1} parent=1 // pred_fallthru
      _
    // Predicated region
    $region6: #{tpu_custom_call.1} parent=1 // pred_check
      _
    $region7: #{tpu_custom_call.1} parent=1 // pred_check_branch
      %16 = sbr.rel (0) target = $region9
    $region8: #{tpu_custom_call.1} parent=1 // pred_region
      _
    $region9: #{tpu_custom_call.1} parent=1 // pred_fallthru
      _
    // Predicated region
    $region10: #{tpu_custom_call.1} parent=1 // pred_check
      _
    $region11: #{tpu_custom_call.1} parent=1 // pred_check_branch
      %18 = sbr.rel (0) target = $region13
    $region12: #{tpu_custom_call.1} parent=1 // pred_region
      %s20 = ssub.s32 10240, 10240
      %21 = vsyncadd [#allocation4], %s20
      %s22 = sshll.u32 [#allocation3], 4
      %s23 = int_to_ptr.vmem [resolvable:$true] %s22
      %28 = dma.hbm_to_vmem [thread:$0]  %s2, 10240, %s23, [#allocation4], 512, 512, 32
    $region13: #{tpu_custom_call.1} parent=1 // pred_fallthru
      _
    // Predicated region
    $region14: #{tpu_custom_call.1} parent=1 // pred_check
      _
    $region15: #{tpu_custom_call.1} parent=1 // pred_check_branch
      %30 = sbr.rel (0) target = $region17
    $region16: #{tpu_custom_call.1} parent=1 // pred_region
      %s32 = ssub.s32 4352, 4352
      %33 = vsyncadd [#allocation7], %s32
      %s34 = sshll.u32 [#allocation6], 4
      %s35 = int_to_ptr.vmem [resolvable:$true] %s34
      %40 = dma.hbm_to_vmem [thread:$0]  %s3, 4352, %s35, [#allocation7], 128, 128, 8
    $region17: #{tpu_custom_call.1} parent=1 // pred_fallthru
      _
    // Predicated region
    $region18: #{tpu_custom_call.1} parent=1 // pred_check
      _
    $region19: #{tpu_custom_call.1} parent=1 // pred_check_branch
      %42 = sbr.rel (0) target = $region21
    $region20: #{tpu_custom_call.1} parent=1 // pred_region
      _
    $region21: #{tpu_custom_call.1} parent=1 // pred_fallthru
      _
    // Predicated region
    $region22: #{tpu_custom_call.1} parent=1 // pred_check
      _
    $region23: #{tpu_custom_call.1} parent=1 // pred_check_branch
      %44 = sbr.rel (0) target = $region25
    $region24: #{tpu_custom_call.1} parent=1 // pred_region
      %45 = dma.done [#allocation4], 10240
    $region25: #{tpu_custom_call.1} parent=1 // pred_fallthru
      _
    // Predicated region
    $region26: #{tpu_custom_call.1} parent=1 // pred_check
      _
    $region27: #{tpu_custom_call.1} parent=1 // pred_check_branch
      %47 = sbr.rel (0) target = $region29
    $region28: #{tpu_custom_call.1} parent=1 // pred_region
      %48 = dma.done [#allocation7], 4352
    $region29: #{tpu_custom_call.1} parent=1 // pred_fallthru
      _
    %v49 = vld [vmem:[%s0] sm:$0xff]
    %v50 = vld [vmem:[%s0 + $0x8] sm:$0xff]
    %v51 = vld [vmem:[%s0 + $0x10] sm:$0xff]
    %v52 = vld [vmem:[%s0 + $0x18] sm:$0xff]
    %v53 = vld [vmem:[%s0 + $0x20] sm:$0xff]
    %v54 = vld [vmem:[%s0 + $0x28] sm:$0xff]
    %v55 = vld [vmem:[%s0 + $0x30] sm:$0xff]
    %v56 = vld [vmem:[%s0 + $0x38] sm:$0xff]
    %v57 = vld [vmem:[#allocation3] sm:$0xff]
    %v58 = vld [vmem:[#allocation3 + $0x8] sm:$0xff]
    %v59 = vld [vmem:[#allocation3 + $0x10] sm:$0xff]
    %v60 = vld [vmem:[#allocation3 + $0x18] sm:$0xff]
    %v61 = vld [vmem:[#allocation3 + $0x20] sm:$0xff]
    %v62 = vld [vmem:[#allocation3 + $0x28] sm:$0xff]
    %v63 = vld [vmem:[#allocation3 + $0x30] sm:$0xff]
    %v64 = vld [vmem:[#allocation3 + $0x38] sm:$0xff]
    %v65 = vld [vmem:[#allocation3 + $0x40] sm:$0xff]
    %v66 = vld [vmem:[#allocation3 + $0x48] sm:$0xff]
    %v67 = vld [vmem:[#allocation3 + $0x50] sm:$0xff]
    %v68 = vld [vmem:[#allocation3 + $0x58] sm:$0xff]
    %v69 = vld [vmem:[#allocation3 + $0x60] sm:$0xff]
    %v70 = vld [vmem:[#allocation3 + $0x68] sm:$0xff]
    %v71 = vld [vmem:[#allocation3 + $0x70] sm:$0xff]
    %v72 = vld [vmem:[#allocation3 + $0x78] sm:$0xff]
    %v73 = vld [vmem:[%s4] sm:$0xf]
    %v75 = vlaneseq
    %v76 = vshrl.u32 %v75, 7
    %v77 = vsub.s32 0, %v76
    %v78 = vrot.slane %v73, %v77
    %v79 = vlaneseq
    %v80 = vshrl.u32 %v79, 7
    %v81 = vsub.s32 1, %v80
    %v82 = vrot.slane %v73, %v81
    %v83 = vlaneseq
    %v84 = vshrl.u32 %v83, 7
    %v85 = vsub.s32 2, %v84
    %v86 = vrot.slane %v73, %v85
    %v87 = vlaneseq
    %v88 = vshrl.u32 %v87, 7
    %v89 = vsub.s32 3, %v88
    %v90 = vrot.slane %v73, %v89
    %vm95 = vcmask 261120
    %v97 = vsel %vm95, %v49, 0
    %v100 = vsel %vm95, %v50, 0
    %v103 = vsel %vm95, %v51, 0
    %v106 = vsel %vm95, %v52, 0
    %v109 = vsel %vm95, %v53, 0
    %v112 = vsel %vm95, %v54, 0
    %v115 = vsel %vm95, %v55, 0
    %v118 = vsel %vm95, %v56, 0
    %120 = vmatprep.subr.mxu0 %v58
    %121 = vmatpush1.msra.mxu0 %v57
    %122 = vmatprep.subr.mxu0 %v62
    %123 = vmatpush1.msra.mxu0 %v61
    %124 = vmatprep.subr.mxu0 %v66
    %125 = vmatpush1.msra.mxu0 %v65
    %126 = vmatprep.subr.mxu0 %v70
    %127 = vmatpush1.msra.mxu0 %v69
    %128 = vmatprep.subr.mxu0 0.0
    %129 = vmatpush1.msra.mxu0 0.0
    %130 = vmatprep.subr.mxu0 0.0
    %131 = vmatpush1.msra.mxu0 0.0
    %132 = vmatprep.subr.mxu0 0.0
    %133 = vmatpush1.msra.mxu0 0.0
    %134 = vmatprep.subr.mxu0 0.0
    %135 = vmatpush1.msra.mxu0 0.0
    %136 = vmatprep.subr.mxu0 0.0
    %137 = vmatpush1.msra.mxu0 0.0
    %138 = vmatprep.subr.mxu0 0.0
    %139 = vmatpush1.msra.mxu0 0.0
    %140 = vmatprep.subr.mxu0 0.0
    %141 = vmatpush1.msra.mxu0 0.0
    %142 = vmatprep.subr.mxu0 0.0
    %143 = vmatpush1.msra.mxu0 0.0
    %144 = vmatprep.subr.mxu0 0.0
    %145 = vmatpush1.msra.mxu0 0.0
    %146 = vmatprep.subr.mxu0 0.0
    %147 = vmatpush1.msra.mxu0 0.0
    %148 = vmatprep.subr.mxu0 0.0
    %149 = vmatpush1.msra.mxu0 0.0
    %150 = vmatprep.subr.mxu0 0.0
    %151 = vmatpush1.msra.mxu0 0.0
    %152 = vmatprep.subr.mxu0 0.0
    %153 = vmatpush1.msra.mxu0 0.0
    %154 = vmatprep.subr.mxu0 0.0
    %155 = vmatpush1.msra.mxu0 0.0
    %156 = vmatprep.subr.mxu0 0.0
    %157 = vmatpush1.msra.mxu0 0.0
    %158 = vmatprep.subr.mxu0 0.0
    %159 = vmatpush1.msra.mxu0 0.0
    %160 = vmatprep.subr.mxu0 0.0
    %161 = vmatpush1.msra.mxu0 0.0
    %162 = vmatprep.subr.mxu0 0.0
    %163 = vmatpush1.msra.mxu0 0.0
    %164 = vmatprep.subr.mxu0 0.0
    %165 = vmatpush1.msra.mxu0 0.0
    %166 = vmatprep.subr.mxu0 0.0
    %167 = vmatpush1.msra.mxu0 0.0
    %168 = vmatprep.subr.mxu0 0.0
    %169 = vmatpush1.msra.mxu0 0.0
    %170 = vmatprep.subr.mxu0 0.0
    %171 = vmatpush1.msra.mxu0 0.0
    %172 = vmatprep.subr.mxu0 0.0
    %173 = vmatpush1.msra.mxu0 0.0
    %174 = vmatprep.subr.mxu0 0.0
    %175 = vmatpush1.msra.mxu0 0.0
    %176 = vmatprep.subr.mxu0 0.0
    %177 = vmatpush1.msra.mxu0 0.0
    %178 = vmatprep.subr.mxu0 0.0
    %179 = vmatpush1.msra.mxu0 0.0
    %180 = vmatprep.subr.mxu0 0.0
    %181 = vmatpush1.msra.mxu0 0.0
    %182 = vmatprep.subr.mxu0 0.0
    %183 = vmatpush1.msra.mxu0 0.0
    %184 = vmatprep.mubr.f32.mxu0 0.0
    %185 = vmatmul.mubr.f32.gmra.mrb[0].mxu0 %v97
    %v186 = vpop.f32.mrb[0].mxu0
    %v187 = vadd.f32 %v78, %v186
    %v188 = vpop.f32.mrb[0].mxu0
    %v189 = vadd.f32 %v82, %v188
    %190 = vmatprep.mubr.f32.mxu0 0.0
    %191 = vmatmul.mubr.f32.gmra.mrb[0].mxu0 %v100
    %v192 = vpop.f32.mrb[0].mxu0
    %v193 = vadd.f32 %v78, %v192
    %v194 = vpop.f32.mrb[0].mxu0
    %v195 = vadd.f32 %v82, %v194
    %196 = vmatprep.mubr.f32.mxu0 0.0
    %197 = vmatmul.mubr.f32.gmra.mrb[0].mxu0 %v103
    %v198 = vpop.f32.mrb[0].mxu0
    %v199 = vadd.f32 %v78, %v198
    %v200 = vpop.f32.mrb[0].mxu0
    %v201 = vadd.f32 %v82, %v200
    %202 = vmatprep.mubr.f32.mxu0 0.0
    %203 = vmatmul.mubr.f32.gmra.mrb[0].mxu0 %v106
    %v204 = vpop.f32.mrb[0].mxu0
    %v205 = vadd.f32 %v78, %v204
    %v206 = vpop.f32.mrb[0].mxu0
    %v207 = vadd.f32 %v82, %v206
    %208 = vmatprep.mubr.f32.mxu0 0.0
    %209 = vmatmul.mubr.f32.gmra.mrb[0].mxu0 %v109
    %v210 = vpop.f32.mrb[0].mxu0
    %v211 = vadd.f32 %v78, %v210
    %v212 = vpop.f32.mrb[0].mxu0
    %v213 = vadd.f32 %v82, %v212
    %214 = vmatprep.mubr.f32.mxu0 0.0
    %215 = vmatmul.mubr.f32.gmra.mrb[0].mxu0 %v112
    %v216 = vpop.f32.mrb[0].mxu0
    %v217 = vadd.f32 %v78, %v216
    %v218 = vpop.f32.mrb[0].mxu0
    %v219 = vadd.f32 %v82, %v218
    %220 = vmatprep.mubr.f32.mxu0 0.0
    %221 = vmatmul.mubr.f32.gmra.mrb[0].mxu0 %v115
    %v222 = vpop.f32.mrb[0].mxu0
    %v223 = vadd.f32 %v78, %v222
    %v224 = vpop.f32.mrb[0].mxu0
    %v225 = vadd.f32 %v82, %v224
    %226 = vmatprep.mubr.f32.mxu0 0.0
    %227 = vmatmul.mubr.f32.gmra.mrb[0].mxu0 %v118
    %v228 = vpop.f32.mrb[0].mxu0
    %v229 = vadd.f32 %v78, %v228
    %v230 = vpop.f32.mrb[0].mxu0
    %v231 = vadd.f32 %v82, %v230
    %232 = vdwg.mxu0
    %233 = vmatprep.subr.mxu0 %v60
    %234 = vmatpush1.msra.mxu0 %v59
    %235 = vmatprep.subr.mxu0 %v64
    %236 = vmatpush1.msra.mxu0 %v63
    %237 = vmatprep.subr.mxu0 %v68
    %238 = vmatpush1.msra.mxu0 %v67
    %239 = vmatprep.subr.mxu0 %v72
    %240 = vmatpush1.msra.mxu0 %v71
    %241 = vmatprep.subr.mxu0 0.0
    %242 = vmatpush1.msra.mxu0 0.0
    %243 = vmatprep.subr.mxu0 0.0
    %244 = vmatpush1.msra.mxu0 0.0
    %245 = vmatprep.subr.mxu0 0.0
    %246 = vmatpush1.msra.mxu0 0.0
    %247 = vmatprep.subr.mxu0 0.0
    %248 = vmatpush1.msra.mxu0 0.0
    %249 = vmatprep.subr.mxu0 0.0
    %250 = vmatpush1.msra.mxu0 0.0
    %251 = vmatprep.subr.mxu0 0.0
    %252 = vmatpush1.msra.mxu0 0.0
    %253 = vmatprep.subr.mxu0 0.0
    %254 = vmatpush1.msra.mxu0 0.0
    %255 = vmatprep.subr.mxu0 0.0
    %256 = vmatpush1.msra.mxu0 0.0
    %257 = vmatprep.subr.mxu0 0.0
    %258 = vmatpush1.msra.mxu0 0.0
    %259 = vmatprep.subr.mxu0 0.0
    %260 = vmatpush1.msra.mxu0 0.0
    %261 = vmatprep.subr.mxu0 0.0
    %262 = vmatpush1.msra.mxu0 0.0
    %263 = vmatprep.subr.mxu0 0.0
    %264 = vmatpush1.msra.mxu0 0.0
    %265 = vmatprep.subr.mxu0 0.0
    %266 = vmatpush1.msra.mxu0 0.0
    %267 = vmatprep.subr.mxu0 0.0
    %268 = vmatpush1.msra.mxu0 0.0
    %269 = vmatprep.subr.mxu0 0.0
    %270 = vmatpush1.msra.mxu0 0.0
    %271 = vmatprep.subr.mxu0 0.0
    %272 = vmatpush1.msra.mxu0 0.0
    %273 = vmatprep.subr.mxu0 0.0
    %274 = vmatpush1.msra.mxu0 0.0
    %275 = vmatprep.subr.mxu0 0.0
    %276 = vmatpush1.msra.mxu0 0.0
    %277 = vmatprep.subr.mxu0 0.0
    %278 = vmatpush1.msra.mxu0 0.0
    %279 = vmatprep.subr.mxu0 0.0
    %280 = vmatpush1.msra.mxu0 0.0
    %281 = vmatprep.subr.mxu0 0.0
    %282 = vmatpush1.msra.mxu0 0.0
    %283 = vmatprep.subr.mxu0 0.0
    %284 = vmatpush1.msra.mxu0 0.0
    %285 = vmatprep.subr.mxu0 0.0
    %286 = vmatpush1.msra.mxu0 0.0
    %287 = vmatprep.subr.mxu0 0.0
    %288 = vmatpush1.msra.mxu0 0.0
    %289 = vmatprep.subr.mxu0 0.0
    %290 = vmatpush1.msra.mxu0 0.0
    %291 = vmatprep.subr.mxu0 0.0
    %292 = vmatpush1.msra.mxu0 0.0
    %293 = vmatprep.subr.mxu0 0.0
    %294 = vmatpush1.msra.mxu0 0.0
    %295 = vmatprep.subr.mxu0 0.0
    %296 = vmatpush1.msra.mxu0 0.0
    %297 = vmatprep.mubr.f32.mxu0 0.0
    %298 = vmatmul.mubr.f32.gmra.mrb[0].mxu0 %v97
    %v299 = vpop.f32.mrb[0].mxu0
    %v300 = vadd.f32 %v86, %v299
    %v301 = vpop.f32.mrb[0].mxu0
    %v302 = vadd.f32 %v90, %v301
    %303 = vmatprep.mubr.f32.mxu0 0.0
    %304 = vmatmul.mubr.f32.gmra.mrb[0].mxu0 %v100
    %v305 = vpop.f32.mrb[0].mxu0
    %v306 = vadd.f32 %v86, %v305
    %v307 = vpop.f32.mrb[0].mxu0
    %v308 = vadd.f32 %v90, %v307
    %309 = vmatprep.mubr.f32.mxu0 0.0
    %310 = vmatmul.mubr.f32.gmra.mrb[0].mxu0 %v103
    %v311 = vpop.f32.mrb[0].mxu0
    %v312 = vadd.f32 %v86, %v311
    %v313 = vpop.f32.mrb[0].mxu0
    %v314 = vadd.f32 %v90, %v313
    %315 = vmatprep.mubr.f32.mxu0 0.0
    %316 = vmatmul.mubr.f32.gmra.mrb[0].mxu0 %v106
    %v317 = vpop.f32.mrb[0].mxu0
    %v318 = vadd.f32 %v86, %v317
    %v319 = vpop.f32.mrb[0].mxu0
    %v320 = vadd.f32 %v90, %v319
    %321 = vmatprep.mubr.f32.mxu0 0.0
    %322 = vmatmul.mubr.f32.gmra.mrb[0].mxu0 %v109
    %v323 = vpop.f32.mrb[0].mxu0
    %v324 = vadd.f32 %v86, %v323
    %v325 = vpop.f32.mrb[0].mxu0
    %v326 = vadd.f32 %v90, %v325
    %327 = vmatprep.mubr.f32.mxu0 0.0
    %328 = vmatmul.mubr.f32.gmra.mrb[0].mxu0 %v112
    %v329 = vpop.f32.mrb[0].mxu0
    %v330 = vadd.f32 %v86, %v329
    %v331 = vpop.f32.mrb[0].mxu0
    %v332 = vadd.f32 %v90, %v331
    %333 = vmatprep.mubr.f32.mxu0 0.0
    %334 = vmatmul.mubr.f32.gmra.mrb[0].mxu0 %v115
    %v335 = vpop.f32.mrb[0].mxu0
    %v336 = vadd.f32 %v86, %v335
    %v337 = vpop.f32.mrb[0].mxu0
    %v338 = vadd.f32 %v90, %v337
    %339 = vmatprep.mubr.f32.mxu0 0.0
    %340 = vmatmul.mubr.f32.gmra.mrb[0].mxu0 %v118
    %v341 = vpop.f32.mrb[0].mxu0
    %v342 = vadd.f32 %v86, %v341
    %v343 = vpop.f32.mrb[0].mxu0
    %v344 = vadd.f32 %v90, %v343
    %345 = vdwg.mxu0
    %346 = vst [vmem:[#allocation2] sm:$0xff] %v187
    %347 = vst [vmem:[#allocation2 + $0x8] sm:$0xff] %v189
    %348 = vst [vmem:[#allocation2 + $0x10] sm:$0xff] %v300
    %349 = vst [vmem:[#allocation2 + $0x18] sm:$0xff] %v302
    %350 = vst [vmem:[#allocation2 + $0x20] sm:$0xff] %v193
    %351 = vst [vmem:[#allocation2 + $0x28] sm:$0xff] %v195
    %352 = vst [vmem:[#allocation2 + $0x30] sm:$0xff] %v306
    %353 = vst [vmem:[#allocation2 + $0x38] sm:$0xff] %v308
    %354 = vst [vmem:[#allocation2 + $0x40] sm:$0xff] %v199
    %355 = vst [vmem:[#allocation2 + $0x48] sm:$0xff] %v201
    %356 = vst [vmem:[#allocation2 + $0x50] sm:$0xff] %v312
    %357 = vst [vmem:[#allocation2 + $0x58] sm:$0xff] %v314
    %358 = vst [vmem:[#allocation2 + $0x60] sm:$0xff] %v205
    %359 = vst [vmem:[#allocation2 + $0x68] sm:$0xff] %v207
    %360 = vst [vmem:[#allocation2 + $0x70] sm:$0xff] %v318
    %361 = vst [vmem:[#allocation2 + $0x78] sm:$0xff] %v320
    %362 = vst [vmem:[#allocation2 + $0x80] sm:$0xff] %v211
    %363 = vst [vmem:[#allocation2 + $0x88] sm:$0xff] %v213
    %364 = vst [vmem:[#allocation2 + $0x90] sm:$0xff] %v324
    %365 = vst [vmem:[#allocation2 + $0x98] sm:$0xff] %v326
    %366 = vst [vmem:[#allocation2 + $0xa0] sm:$0xff] %v217
    %367 = vst [vmem:[#allocation2 + $0xa8] sm:$0xff] %v219
    %368 = vst [vmem:[#allocation2 + $0xb0] sm:$0xff] %v330
    %369 = vst [vmem:[#allocation2 + $0xb8] sm:$0xff] %v332
    %370 = vst [vmem:[#allocation2 + $0xc0] sm:$0xff] %v223
    %371 = vst [vmem:[#allocation2 + $0xc8] sm:$0xff] %v225
    %372 = vst [vmem:[#allocation2 + $0xd0] sm:$0xff] %v336
    %373 = vst [vmem:[#allocation2 + $0xd8] sm:$0xff] %v338
    %374 = vst [vmem:[#allocation2 + $0xe0] sm:$0xff] %v229
    %375 = vst [vmem:[#allocation2 + $0xe8] sm:$0xff] %v231
    %376 = vst [vmem:[#allocation2 + $0xf0] sm:$0xff] %v342
    %377 = vst [vmem:[#allocation2 + $0xf8] sm:$0xff] %v344
    %v378 = vld [vmem:[#allocation3 + $0x80] sm:$0xff]
    %v379 = vld [vmem:[#allocation3 + $0x88] sm:$0xff]
    %v380 = vld [vmem:[#allocation3 + $0x90] sm:$0xff]
    %v381 = vld [vmem:[#allocation3 + $0x98] sm:$0xff]
    %v382 = vld [vmem:[#allocation3 + $0xa0] sm:$0xff]
    %v383 = vld [vmem:[#allocation3 + $0xa8] sm:$0xff]
    %v384 = vld [vmem:[#allocation3 + $0xb0] sm:$0xff]
    %v385 = vld [vmem:[#allocation3 + $0xb8] sm:$0xff]
    %v386 = vld [vmem:[#allocation3 + $0xc0] sm:$0xff]
    %v387 = vld [vmem:[#allocation3 + $0xc8] sm:$0xff]
    %v388 = vld [vmem:[#allocation3 + $0xd0] sm:$0xff]
    %v389 = vld [vmem:[#allocation3 + $0xd8] sm:$0xff]
    %v390 = vld [vmem:[#allocation3 + $0xe0] sm:$0xff]
    %v391 = vld [vmem:[#allocation3 + $0xe8] sm:$0xff]
    %v392 = vld [vmem:[#allocation3 + $0xf0] sm:$0xff]
    %v393 = vld [vmem:[#allocation3 + $0xf8] sm:$0xff]
    %v394 = vld [vmem:[#allocation3 + $0x100] sm:$0xff]
    %v395 = vld [vmem:[#allocation3 + $0x108] sm:$0xff]
    %v396 = vld [vmem:[#allocation3 + $0x110] sm:$0xff]
    %v397 = vld [vmem:[#allocation3 + $0x118] sm:$0xff]
    %v398 = vld [vmem:[#allocation3 + $0x120] sm:$0xff]
    %v399 = vld [vmem:[#allocation3 + $0x128] sm:$0xff]
    %v400 = vld [vmem:[#allocation3 + $0x130] sm:$0xff]
    %v401 = vld [vmem:[#allocation3 + $0x138] sm:$0xff]
    %v402 = vld [vmem:[#allocation3 + $0x140] sm:$0xff]
    %v403 = vld [vmem:[#allocation3 + $0x148] sm:$0xff]
    %v404 = vld [vmem:[#allocation3 + $0x150] sm:$0xff]
    %v405 = vld [vmem:[#allocation3 + $0x158] sm:$0xff]
    %v406 = vld [vmem:[#allocation3 + $0x160] sm:$0xff]
    %v407 = vld [vmem:[#allocation3 + $0x168] sm:$0xff]
    %v408 = vld [vmem:[#allocation3 + $0x170] sm:$0xff]
    %v409 = vld [vmem:[#allocation3 + $0x178] sm:$0xff]
    %v410 = vld [vmem:[#allocation3 + $0x180] sm:$0xff]
    %v411 = vld [vmem:[#allocation3 + $0x188] sm:$0xff]
    %v412 = vld [vmem:[#allocation3 + $0x190] sm:$0xff]
    %v413 = vld [vmem:[#allocation3 + $0x198] sm:$0xff]
    %v414 = vld [vmem:[#allocation3 + $0x1a0] sm:$0xff]
    %v415 = vld [vmem:[#allocation3 + $0x1a8] sm:$0xff]
    %v416 = vld [vmem:[#allocation3 + $0x1b0] sm:$0xff]
    %v417 = vld [vmem:[#allocation3 + $0x1b8] sm:$0xff]
    %v418 = vld [vmem:[#allocation3 + $0x1c0] sm:$0xff]
    %v419 = vld [vmem:[#allocation3 + $0x1c8] sm:$0xff]
    %v420 = vld [vmem:[#allocation3 + $0x1d0] sm:$0xff]
    %v421 = vld [vmem:[#allocation3 + $0x1d8] sm:$0xff]
    %v422 = vld [vmem:[#allocation3 + $0x1e0] sm:$0xff]
    %v423 = vld [vmem:[#allocation3 + $0x1e8] sm:$0xff]
    %v424 = vld [vmem:[#allocation3 + $0x1f0] sm:$0xff]
    %v425 = vld [vmem:[#allocation3 + $0x1f8] sm:$0xff]
    %v426 = vld [vmem:[#allocation3 + $0x200] sm:$0xff]
    %v427 = vld [vmem:[#allocation3 + $0x208] sm:$0xff]
    %v428 = vld [vmem:[#allocation3 + $0x210] sm:$0xff]
    %v429 = vld [vmem:[#allocation3 + $0x218] sm:$0xff]
    %v430 = vld [vmem:[#allocation3 + $0x220] sm:$0xff]
    %v431 = vld [vmem:[#allocation3 + $0x228] sm:$0xff]
    %v432 = vld [vmem:[#allocation3 + $0x230] sm:$0xff]
    %v433 = vld [vmem:[#allocation3 + $0x238] sm:$0xff]
    %v434 = vld [vmem:[#allocation3 + $0x240] sm:$0xff]
    %v435 = vld [vmem:[#allocation3 + $0x248] sm:$0xff]
    %v436 = vld [vmem:[#allocation3 + $0x250] sm:$0xff]
    %v437 = vld [vmem:[#allocation3 + $0x258] sm:$0xff]
    %v438 = vld [vmem:[#allocation3 + $0x260] sm:$0xff]
    %v439 = vld [vmem:[#allocation3 + $0x268] sm:$0xff]
    %v440 = vld [vmem:[#allocation3 + $0x270] sm:$0xff]
    %v441 = vld [vmem:[#allocation3 + $0x278] sm:$0xff]
    %v442 = vld [vmem:[#allocation2] sm:$0xff]
    %v443 = vld [vmem:[#allocation2 + $0x8] sm:$0xff]
    %v444 = vld [vmem:[#allocation2 + $0x10] sm:$0xff]
    %v445 = vld [vmem:[#allocation2 + $0x18] sm:$0xff]
    %446 = vmatprep.subr.mxu0 %v379
    %447 = vmatpush1.msra.mxu0 %v378
    %448 = vmatprep.subr.mxu0 %v383
    %449 = vmatpush1.msra.mxu0 %v382
    %450 = vmatprep.subr.mxu0 %v387
    %451 = vmatpush1.msra.mxu0 %v386
    %452 = vmatprep.subr.mxu0 %v391
    %453 = vmatpush1.msra.mxu0 %v390
    %454 = vmatprep.subr.mxu0 %v395
    %455 = vmatpush1.msra.mxu0 %v394
    %456 = vmatprep.subr.mxu0 %v399
    %457 = vmatpush1.msra.mxu0 %v398
    %458 = vmatprep.subr.mxu0 %v403
    %459 = vmatpush1.msra.mxu0 %v402
    %460 = vmatprep.subr.mxu0 %v407
    %461 = vmatpush1.msra.mxu0 %v406
    %462 = vmatprep.subr.mxu0 %v411
    %463 = vmatpush1.msra.mxu0 %v410
    %464 = vmatprep.subr.mxu0 %v415
    %465 = vmatpush1.msra.mxu0 %v414
    %466 = vmatprep.subr.mxu0 %v419
    %467 = vmatpush1.msra.mxu0 %v418
    %468 = vmatprep.subr.mxu0 %v423
    %469 = vmatpush1.msra.mxu0 %v422
    %470 = vmatprep.subr.mxu0 %v427
    %471 = vmatpush1.msra.mxu0 %v426
    %472 = vmatprep.subr.mxu0 %v431
    %473 = vmatpush1.msra.mxu0 %v430
    %474 = vmatprep.subr.mxu0 %v435
    %475 = vmatpush1.msra.mxu0 %v434
    %476 = vmatprep.subr.mxu0 %v439
    %477 = vmatpush1.msra.mxu0 %v438
    %478 = vmatprep.subr.mxu0 0.0
    %479 = vmatpush1.msra.mxu0 0.0
    %480 = vmatprep.subr.mxu0 0.0
    %481 = vmatpush1.msra.mxu0 0.0
    %482 = vmatprep.subr.mxu0 0.0
    %483 = vmatpush1.msra.mxu0 0.0
    %484 = vmatprep.subr.mxu0 0.0
    %485 = vmatpush1.msra.mxu0 0.0
    %486 = vmatprep.subr.mxu0 0.0
    %487 = vmatpush1.msra.mxu0 0.0
    %488 = vmatprep.subr.mxu0 0.0
    %489 = vmatpush1.msra.mxu0 0.0
    %490 = vmatprep.subr.mxu0 0.0
    %491 = vmatpush1.msra.mxu0 0.0
    %492 = vmatprep.subr.mxu0 0.0
    %493 = vmatpush1.msra.mxu0 0.0
    %494 = vmatprep.subr.mxu0 0.0
    %495 = vmatpush1.msra.mxu0 0.0
    %496 = vmatprep.subr.mxu0 0.0
    %497 = vmatpush1.msra.mxu0 0.0
    %498 = vmatprep.subr.mxu0 0.0
    %499 = vmatpush1.msra.mxu0 0.0
    %500 = vmatprep.subr.mxu0 0.0
    %501 = vmatpush1.msra.mxu0 0.0
    %502 = vmatprep.subr.mxu0 0.0
    %503 = vmatpush1.msra.mxu0 0.0
    %504 = vmatprep.subr.mxu0 0.0
    %505 = vmatpush1.msra.mxu0 0.0
    %506 = vmatprep.subr.mxu0 0.0
    %507 = vmatpush1.msra.mxu0 0.0
    %508 = vmatprep.subr.mxu0 0.0
    %509 = vmatpush1.msra.mxu0 0.0
    %510 = vmatprep.mubr.f32.mxu0 0.0
    %511 = vmatmul.mubr.f32.gmra.mrb[0].mxu0 0.0
    %v512 = vpop.f32.mrb[0].mxu0
    %v513 = vadd.f32 0.0, %v512
    %v514 = vpop.f32.mrb[0].mxu0
    %v515 = vadd.f32 0.0, %v514
    %516 = vdwg.mxu0
    %517 = vmatprep.subr.mxu0 %v381
    %518 = vmatpush1.msra.mxu0 %v380
    %519 = vmatprep.subr.mxu0 %v385
    %520 = vmatpush1.msra.mxu0 %v384
    %521 = vmatprep.subr.mxu0 %v389
    %522 = vmatpush1.msra.mxu0 %v388
    %523 = vmatprep.subr.mxu0 %v393
    %524 = vmatpush1.msra.mxu0 %v392
    %525 = vmatprep.subr.mxu0 %v397
    %526 = vmatpush1.msra.mxu0 %v396
    %527 = vmatprep.subr.mxu0 %v401
    %528 = vmatpush1.msra.mxu0 %v400
    %529 = vmatprep.subr.mxu0 %v405
    %530 = vmatpush1.msra.mxu0 %v404
    %531 = vmatprep.subr.mxu0 %v409
    %532 = vmatpush1.msra.mxu0 %v408
    %533 = vmatprep.subr.mxu0 %v413
    %534 = vmatpush1.msra.mxu0 %v412
    %535 = vmatprep.subr.mxu0 %v417
    %536 = vmatpush1.msra.mxu0 %v416
    %537 = vmatprep.subr.mxu0 %v421
    %538 = vmatpush1.msra.mxu0 %v420
    %539 = vmatprep.subr.mxu0 %v425
    %540 = vmatpush1.msra.mxu0 %v424
    %541 = vmatprep.subr.mxu0 %v429
    %542 = vmatpush1.msra.mxu0 %v428
    %543 = vmatprep.subr.mxu0 %v433
    %544 = vmatpush1.msra.mxu0 %v432
    %545 = vmatprep.subr.mxu0 %v437
    %546 = vmatpush1.msra.mxu0 %v436
    %547 = vmatprep.subr.mxu0 %v441
    %548 = vmatpush1.msra.mxu0 %v440
    %549 = vmatprep.subr.mxu0 0.0
    %550 = vmatpush1.msra.mxu0 0.0
    %551 = vmatprep.subr.mxu0 0.0
    %552 = vmatpush1.msra.mxu0 0.0
    %553 = vmatprep.subr.mxu0 0.0
    %554 = vmatpush1.msra.mxu0 0.0
    %555 = vmatprep.subr.mxu0 0.0
    %556 = vmatpush1.msra.mxu0 0.0
    %557 = vmatprep.subr.mxu0 0.0
    %558 = vmatpush1.msra.mxu0 0.0
    %559 = vmatprep.subr.mxu0 0.0
    %560 = vmatpush1.msra.mxu0 0.0
    %561 = vmatprep.subr.mxu0 0.0
    %562 = vmatpush1.msra.mxu0 0.0
    %563 = vmatprep.subr.mxu0 0.0
    %564 = vmatpush1.msra.mxu0 0.0
    %565 = vmatprep.subr.mxu0 0.0
    %566 = vmatpush1.msra.mxu0 0.0
    %567 = vmatprep.subr.mxu0 0.0
    %568 = vmatpush1.msra.mxu0 0.0
    %569 = vmatprep.subr.mxu0 0.0
    %570 = vmatpush1.msra.mxu0 0.0
    %571 = vmatprep.subr.mxu0 0.0
    %572 = vmatpush1.msra.mxu0 0.0
    %573 = vmatprep.subr.mxu0 0.0
    %574 = vmatpush1.msra.mxu0 0.0
    %575 = vmatprep.subr.mxu0 0.0
    %576 = vmatpush1.msra.mxu0 0.0
    %577 = vmatprep.subr.mxu0 0.0
    %578 = vmatpush1.msra.mxu0 0.0
    %579 = vmatprep.subr.mxu0 0.0
    %580 = vmatpush1.msra.mxu0 0.0
    %581 = vmatprep.mubr.f32.mxu0 0.0
    %582 = vmatmul.mubr.f32.gmra.mrb[0].mxu0 0.0
    %v583 = vpop.f32.mrb[0].mxu0
    %v584 = vadd.f32 0.0, %v583
    %v585 = vpop.f32.mrb[0].mxu0
    %v586 = vadd.f32 0.0, %v585
    %587 = vdwg.mxu0
    %v588 = vadd.f32 %v442, %v513
    %v589 = vadd.f32 %v443, %v515
    %v590 = vadd.f32 %v444, %v584
    %v591 = vadd.f32 %v445, %v586
    %v592 = vxor.u32 %v588, 2147483648
    %v593 = vxor.u32 %v589, 2147483648
    %v594 = vxor.u32 %v590, 2147483648
    %v595 = vmul.f32 %v592, 1.442695
    %v596 = vpow.pop %v595
    %v597 = vmul.f32 %v593, 1.442695
    %v598 = vpow.pop %v597
    %v599 = vmul.f32 %v594, 1.442695
    %v600 = vpow.pop %v599
    %v601 = vadd.f32 %v596, 1.0
    %v602 = vadd.f32 %v598, 1.0
    %v603 = vadd.f32 %v600, 1.0
    %v604 = vrcp.pop %v601
    %v605 = vmul.f32 1.0, %v604
    %v606 = vrcp.pop %v602
    %v607 = vmul.f32 1.0, %v606
    %v608 = vrcp.pop %v603
    %v609 = vmul.f32 1.0, %v608
    %v610 = vtanh.pop %v591
    %v611 = vmul.f32 %v607, 0.0
    %v612 = vmul.f32 %v605, %v610
    %v613 = vadd.f32 %v611, %v612
    %v614 = vtanh.pop %v613
    %v615 = vmul.f32 %v609, %v614
    %v616 = vld [vmem:[#allocation2 + $0x20] sm:$0xff]
    %v617 = vld [vmem:[#allocation2 + $0x28] sm:$0xff]
    %v618 = vld [vmem:[#allocation2 + $0x30] sm:$0xff]
    %v619 = vld [vmem:[#allocation2 + $0x38] sm:$0xff]
    %620 = vmatprep.subr.mxu0 %v379
    %621 = vmatpush1.msra.mxu0 %v378
    %622 = vmatprep.subr.mxu0 %v383
    %623 = vmatpush1.msra.mxu0 %v382
    %624 = vmatprep.subr.mxu0 %v387
    %625 = vmatpush1.msra.mxu0 %v386
    %626 = vmatprep.subr.mxu0 %v391
    %627 = vmatpush1.msra.mxu0 %v390
    %628 = vmatprep.subr.mxu0 %v395
    %629 = vmatpush1.msra.mxu0 %v394
    %630 = vmatprep.subr.mxu0 %v399
    %631 = vmatpush1.msra.mxu0 %v398
    %632 = vmatprep.subr.mxu0 %v403
    %633 = vmatpush1.msra.mxu0 %v402
    %634 = vmatprep.subr.mxu0 %v407
    %635 = vmatpush1.msra.mxu0 %v406
    %636 = vmatprep.subr.mxu0 %v411
    %637 = vmatpush1.msra.mxu0 %v410
    %638 = vmatprep.subr.mxu0 %v415
    %639 = vmatpush1.msra.mxu0 %v414
    %640 = vmatprep.subr.mxu0 %v419
    %641 = vmatpush1.msra.mxu0 %v418
    %642 = vmatprep.subr.mxu0 %v423
    %643 = vmatpush1.msra.mxu0 %v422
    %644 = vmatprep.subr.mxu0 %v427
    %645 = vmatpush1.msra.mxu0 %v426
    %646 = vmatprep.subr.mxu0 %v431
    %647 = vmatpush1.msra.mxu0 %v430
    %648 = vmatprep.subr.mxu0 %v435
    %649 = vmatpush1.msra.mxu0 %v434
    %650 = vmatprep.subr.mxu0 %v439
    %651 = vmatpush1.msra.mxu0 %v438
    %652 = vmatprep.subr.mxu0 0.0
    %653 = vmatpush1.msra.mxu0 0.0
    %654 = vmatprep.subr.mxu0 0.0
    %655 = vmatpush1.msra.mxu0 0.0
    %656 = vmatprep.subr.mxu0 0.0
    %657 = vmatpush1.msra.mxu0 0.0
    %658 = vmatprep.subr.mxu0 0.0
    %659 = vmatpush1.msra.mxu0 0.0
    %660 = vmatprep.subr.mxu0 0.0
    %661 = vmatpush1.msra.mxu0 0.0
    %662 = vmatprep.subr.mxu0 0.0
    %663 = vmatpush1.msra.mxu0 0.0
    %664 = vmatprep.subr.mxu0 0.0
    %665 = vmatpush1.msra.mxu0 0.0
    %666 = vmatprep.subr.mxu0 0.0
    %667 = vmatpush1.msra.mxu0 0.0
    %668 = vmatprep.subr.mxu0 0.0
    %669 = vmatpush1.msra.mxu0 0.0
    %670 = vmatprep.subr.mxu0 0.0
    %671 = vmatpush1.msra.mxu0 0.0
    %672 = vmatprep.subr.mxu0 0.0
    %673 = vmatpush1.msra.mxu0 0.0
    %674 = vmatprep.subr.mxu0 0.0
    %675 = vmatpush1.msra.mxu0 0.0
    %676 = vmatprep.subr.mxu0 0.0
    %677 = vmatpush1.msra.mxu0 0.0
    %678 = vmatprep.subr.mxu0 0.0
    %679 = vmatpush1.msra.mxu0 0.0
    %680 = vmatprep.subr.mxu0 0.0
    %681 = vmatpush1.msra.mxu0 0.0
    %682 = vmatprep.subr.mxu0 0.0
    %683 = vmatpush1.msra.mxu0 0.0
    %684 = vmatprep.mubr.f32.mxu0 0.0
    %685 = vmatmul.mubr.f32.gmra.mrb[0].mxu0 %v615
    %v686 = vpop.f32.mrb[0].mxu0
    %v687 = vadd.f32 0.0, %v686
    %v688 = vpop.f32.mrb[0].mxu0
    %v689 = vadd.f32 0.0, %v688
    %690 = vdwg.mxu0
    %691 = vmatprep.subr.mxu0 %v381
    %692 = vmatpush1.msra.mxu0 %v380
    %693 = vmatprep.subr.mxu0 %v385
    %694 = vmatpush1.msra.mxu0 %v384
    %695 = vmatprep.subr.mxu0 %v389
    %696 = vmatpush1.msra.mxu0 %v388
    %697 = vmatprep.subr.mxu0 %v393
    %698 = vmatpush1.msra.mxu0 %v392
    %699 = vmatprep.subr.mxu0 %v397
    %700 = vmatpush1.msra.mxu0 %v396
    %701 = vmatprep.subr.mxu0 %v401
    %702 = vmatpush1.msra.mxu0 %v400
    %703 = vmatprep.subr.mxu0 %v405
    %704 = vmatpush1.msra.mxu0 %v404
    %705 = vmatprep.subr.mxu0 %v409
    %706 = vmatpush1.msra.mxu0 %v408
    %707 = vmatprep.subr.mxu0 %v413
    %708 = vmatpush1.msra.mxu0 %v412
    %709 = vmatprep.subr.mxu0 %v417
    %710 = vmatpush1.msra.mxu0 %v416
    %711 = vmatprep.subr.mxu0 %v421
    %712 = vmatpush1.msra.mxu0 %v420
    %713 = vmatprep.subr.mxu0 %v425
    %714 = vmatpush1.msra.mxu0 %v424
    %715 = vmatprep.subr.mxu0 %v429
    %716 = vmatpush1.msra.mxu0 %v428
    %717 = vmatprep.subr.mxu0 %v433
    %718 = vmatpush1.msra.mxu0 %v432
    %719 = vmatprep.subr.mxu0 %v437
    %720 = vmatpush1.msra.mxu0 %v436
    %721 = vmatprep.subr.mxu0 %v441
    %722 = vmatpush1.msra.mxu0 %v440
    %723 = vmatprep.subr.mxu0 0.0
    %724 = vmatpush1.msra.mxu0 0.0
    %725 = vmatprep.subr.mxu0 0.0
    %726 = vmatpush1.msra.mxu0 0.0
    %727 = vmatprep.subr.mxu0 0.0
    %728 = vmatpush1.msra.mxu0 0.0
    %729 = vmatprep.subr.mxu0 0.0
    %730 = vmatpush1.msra.mxu0 0.0
    %731 = vmatprep.subr.mxu0 0.0
    %732 = vmatpush1.msra.mxu0 0.0
    %733 = vmatprep.subr.mxu0 0.0
    %734 = vmatpush1.msra.mxu0 0.0
    %735 = vmatprep.subr.mxu0 0.0
    %736 = vmatpush1.msra.mxu0 0.0
    %737 = vmatprep.subr.mxu0 0.0
    %738 = vmatpush1.msra.mxu0 0.0
    %739 = vmatprep.subr.mxu0 0.0
    %740 = vmatpush1.msra.mxu0 0.0
    %741 = vmatprep.subr.mxu0 0.0
    %742 = vmatpush1.msra.mxu0 0.0
    %743 = vmatprep.subr.mxu0 0.0
    %744 = vmatpush1.msra.mxu0 0.0
    %745 = vmatprep.subr.mxu0 0.0
    %746 = vmatpush1.msra.mxu0 0.0
    %747 = vmatprep.subr.mxu0 0.0
    %748 = vmatpush1.msra.mxu0 0.0
    %749 = vmatprep.subr.mxu0 0.0
    %750 = vmatpush1.msra.mxu0 0.0
    %751 = vmatprep.subr.mxu0 0.0
    %752 = vmatpush1.msra.mxu0 0.0
    %753 = vmatprep.subr.mxu0 0.0
    %754 = vmatpush1.msra.mxu0 0.0
    %755 = vmatprep.mubr.f32.mxu0 0.0
    %756 = vmatmul.mubr.f32.gmra.mrb[0].mxu0 %v615
    %v757 = vpop.f32.mrb[0].mxu0
    %v758 = vadd.f32 0.0, %v757
    %v759 = vpop.f32.mrb[0].mxu0
    %v760 = vadd.f32 0.0, %v759
    %761 = vdwg.mxu0
    %v762 = vadd.f32 %v616, %v687
    %v763 = vadd.f32 %v617, %v689
    %v764 = vadd.f32 %v618, %v758
    %v765 = vadd.f32 %v619, %v760
    %v766 = vxor.u32 %v762, 2147483648
    %v767 = vxor.u32 %v763, 2147483648
    %v768 = vxor.u32 %v764, 2147483648
    %v769 = vmul.f32 %v766, 1.442695
    %v770 = vpow.pop %v769
    %v771 = vmul.f32 %v767, 1.442695
    %v772 = vpow.pop %v771
    %v773 = vmul.f32 %v768, 1.442695
    %v774 = vpow.pop %v773
    %v775 = vadd.f32 %v770, 1.0
    %v776 = vadd.f32 %v772, 1.0
    %v777 = vadd.f32 %v774, 1.0
    %v778 = vrcp.pop %v775
    %v779 = vmul.f32 1.0, %v778
    %v780 = vrcp.pop %v776
    %v781 = vmul.f32 1.0, %v780
    %v782 = vrcp.pop %v777
    %v783 = vmul.f32 1.0, %v782
    %v784 = vtanh.pop %v765
    %v785 = vmul.f32 %v781, %v613
    %v786 = vmul.f32 %v779, %v784
    %v787 = vadd.f32 %v785, %v786
    %v788 = vtanh.pop %v787
    %v789 = vmul.f32 %v783, %v788
    %v790 = vld [vmem:[#allocation2 + $0x40] sm:$0xff]
    %v791 = vld [vmem:[#allocation2 + $0x48] sm:$0xff]
    %v792 = vld [vmem:[#allocation2 + $0x50] sm:$0xff]
    %v793 = vld [vmem:[#allocation2 + $0x58] sm:$0xff]
    %794 = vmatprep.subr.mxu0 %v379
    %795 = vmatpush1.msra.mxu0 %v378
    %796 = vmatprep.subr.mxu0 %v383
    %797 = vmatpush1.msra.mxu0 %v382
    %798 = vmatprep.subr.mxu0 %v387
    %799 = vmatpush1.msra.mxu0 %v386
    %800 = vmatprep.subr.mxu0 %v391
    %801 = vmatpush1.msra.mxu0 %v390
    %802 = vmatprep.subr.mxu0 %v395
    %803 = vmatpush1.msra.mxu0 %v394
    %804 = vmatprep.subr.mxu0 %v399
    %805 = vmatpush1.msra.mxu0 %v398
    %806 = vmatprep.subr.mxu0 %v403
    %807 = vmatpush1.msra.mxu0 %v402
    %808 = vmatprep.subr.mxu0 %v407
    %809 = vmatpush1.msra.mxu0 %v406
    %810 = vmatprep.subr.mxu0 %v411
    %811 = vmatpush1.msra.mxu0 %v410
    %812 = vmatprep.subr.mxu0 %v415
    %813 = vmatpush1.msra.mxu0 %v414
    %814 = vmatprep.subr.mxu0 %v419
    %815 = vmatpush1.msra.mxu0 %v418
    %816 = vmatprep.subr.mxu0 %v423
    %817 = vmatpush1.msra.mxu0 %v422
    %818 = vmatprep.subr.mxu0 %v427
    %819 = vmatpush1.msra.mxu0 %v426
    %820 = vmatprep.subr.mxu0 %v431
    %821 = vmatpush1.msra.mxu0 %v430
    %822 = vmatprep.subr.mxu0 %v435
    %823 = vmatpush1.msra.mxu0 %v434
    %824 = vmatprep.subr.mxu0 %v439
    %825 = vmatpush1.msra.mxu0 %v438
    %826 = vmatprep.subr.mxu0 0.0
    %827 = vmatpush1.msra.mxu0 0.0
    %828 = vmatprep.subr.mxu0 0.0
    %829 = vmatpush1.msra.mxu0 0.0
    %830 = vmatprep.subr.mxu0 0.0
    %831 = vmatpush1.msra.mxu0 0.0
    %832 = vmatprep.subr.mxu0 0.0
    %833 = vmatpush1.msra.mxu0 0.0
    %834 = vmatprep.subr.mxu0 0.0
    %835 = vmatpush1.msra.mxu0 0.0
    %836 = vmatprep.subr.mxu0 0.0
    %837 = vmatpush1.msra.mxu0 0.0
    %838 = vmatprep.subr.mxu0 0.0
    %839 = vmatpush1.msra.mxu0 0.0
    %840 = vmatprep.subr.mxu0 0.0
    %841 = vmatpush1.msra.mxu0 0.0
    %842 = vmatprep.subr.mxu0 0.0
    %843 = vmatpush1.msra.mxu0 0.0
    %844 = vmatprep.subr.mxu0 0.0
    %845 = vmatpush1.msra.mxu0 0.0
    %846 = vmatprep.subr.mxu0 0.0
    %847 = vmatpush1.msra.mxu0 0.0
    %848 = vmatprep.subr.mxu0 0.0
    %849 = vmatpush1.msra.mxu0 0.0
    %850 = vmatprep.subr.mxu0 0.0
    %851 = vmatpush1.msra.mxu0 0.0
    %852 = vmatprep.subr.mxu0 0.0
    %853 = vmatpush1.msra.mxu0 0.0
    %854 = vmatprep.subr.mxu0 0.0
    %855 = vmatpush1.msra.mxu0 0.0
    %856 = vmatprep.subr.mxu0 0.0
    %857 = vmatpush1.msra.mxu0 0.0
    %858 = vmatprep.mubr.f32.mxu0 0.0
    %859 = vmatmul.mubr.f32.gmra.mrb[0].mxu0 %v789
    %v860 = vpop.f32.mrb[0].mxu0
    %v861 = vadd.f32 0.0, %v860
    %v862 = vpop.f32.mrb[0].mxu0
    %v863 = vadd.f32 0.0, %v862
    %864 = vdwg.mxu0
    %865 = vmatprep.subr.mxu0 %v381
    %866 = vmatpush1.msra.mxu0 %v380
    %867 = vmatprep.subr.mxu0 %v385
    %868 = vmatpush1.msra.mxu0 %v384
    %869 = vmatprep.subr.mxu0 %v389
    %870 = vmatpush1.msra.mxu0 %v388
    %871 = vmatprep.subr.mxu0 %v393
    %872 = vmatpush1.msra.mxu0 %v392
    %873 = vmatprep.subr.mxu0 %v397
    %874 = vmatpush1.msra.mxu0 %v396
    %875 = vmatprep.subr.mxu0 %v401
    %876 = vmatpush1.msra.mxu0 %v400
    %877 = vmatprep.subr.mxu0 %v405
    %878 = vmatpush1.msra.mxu0 %v404
    %879 = vmatprep.subr.mxu0 %v409
    %880 = vmatpush1.msra.mxu0 %v408
    %881 = vmatprep.subr.mxu0 %v413
    %882 = vmatpush1.msra.mxu0 %v412
    %883 = vmatprep.subr.mxu0 %v417
    %884 = vmatpush1.msra.mxu0 %v416
    %885 = vmatprep.subr.mxu0 %v421
    %886 = vmatpush1.msra.mxu0 %v420
    %887 = vmatprep.subr.mxu0 %v425
    %888 = vmatpush1.msra.mxu0 %v424
    %889 = vmatprep.subr.mxu0 %v429
    %890 = vmatpush1.msra.mxu0 %v428
    %891 = vmatprep.subr.mxu0 %v433
    %892 = vmatpush1.msra.mxu0 %v432
    %893 = vmatprep.subr.mxu0 %v437
    %894 = vmatpush1.msra.mxu0 %v436
    %895 = vmatprep.subr.mxu0 %v441
    %896 = vmatpush1.msra.mxu0 %v440
    %897 = vmatprep.subr.mxu0 0.0
    %898 = vmatpush1.msra.mxu0 0.0
    %899 = vmatprep.subr.mxu0 0.0
    %900 = vmatpush1.msra.mxu0 0.0
    %901 = vmatprep.subr.mxu0 0.0
    %902 = vmatpush1.msra.mxu0 0.0
    %903 = vmatprep.subr.mxu0 0.0
    %904 = vmatpush1.msra.mxu0 0.0
    %905 = vmatprep.subr.mxu0 0.0
    %906 = vmatpush1.msra.mxu0 0.0
    %907 = vmatprep.subr.mxu0 0.0
    %908 = vmatpush1.msra.mxu0 0.0
    %909 = vmatprep.subr.mxu0 0.0
    %910 = vmatpush1.msra.mxu0 0.0
    %911 = vmatprep.subr.mxu0 0.0
    %912 = vmatpush1.msra.mxu0 0.0
    %913 = vmatprep.subr.mxu0 0.0
    %914 = vmatpush1.msra.mxu0 0.0
    %915 = vmatprep.subr.mxu0 0.0
    %916 = vmatpush1.msra.mxu0 0.0
    %917 = vmatprep.subr.mxu0 0.0
    %918 = vmatpush1.msra.mxu0 0.0
    %919 = vmatprep.subr.mxu0 0.0
    %920 = vmatpush1.msra.mxu0 0.0
    %921 = vmatprep.subr.mxu0 0.0
    %922 = vmatpush1.msra.mxu0 0.0
    %923 = vmatprep.subr.mxu0 0.0
    %924 = vmatpush1.msra.mxu0 0.0
    %925 = vmatprep.subr.mxu0 0.0
    %926 = vmatpush1.msra.mxu0 0.0
    %927 = vmatprep.subr.mxu0 0.0
    %928 = vmatpush1.msra.mxu0 0.0
    %929 = vmatprep.mubr.f32.mxu0 0.0
    %930 = vmatmul.mubr.f32.gmra.mrb[0].mxu0 %v789
    %v931 = vpop.f32.mrb[0].mxu0
    %v932 = vadd.f32 0.0, %v931
    %v933 = vpop.f32.mrb[0].mxu0
    %v934 = vadd.f32 0.0, %v933
    %935 = vdwg.mxu0
    %v936 = vadd.f32 %v790, %v861
    %v937 = vadd.f32 %v791, %v863
    %v938 = vadd.f32 %v792, %v932
    %v939 = vadd.f32 %v793, %v934
    %v940 = vxor.u32 %v936, 2147483648
    %v941 = vxor.u32 %v937, 2147483648
    %v942 = vxor.u32 %v938, 2147483648
    %v943 = vmul.f32 %v940, 1.442695
    %v944 = vpow.pop %v943
    %v945 = vmul.f32 %v941, 1.442695
    %v946 = vpow.pop %v945
    %v947 = vmul.f32 %v942, 1.442695
    %v948 = vpow.pop %v947
    %v949 = vadd.f32 %v944, 1.0
    %v950 = vadd.f32 %v946, 1.0
    %v951 = vadd.f32 %v948, 1.0
    %v952 = vrcp.pop %v949
    %v953 = vmul.f32 1.0, %v952
    %v954 = vrcp.pop %v950
    %v955 = vmul.f32 1.0, %v954
    %v956 = vrcp.pop %v951
    %v957 = vmul.f32 1.0, %v956
    %v958 = vtanh.pop %v939
    %v959 = vmul.f32 %v955, %v787
    %v960 = vmul.f32 %v953, %v958
    %v961 = vadd.f32 %v959, %v960
    %v962 = vtanh.pop %v961
    %v963 = vmul.f32 %v957, %v962
    %v964 = vld [vmem:[#allocation2 + $0x60] sm:$0xff]
    %v965 = vld [vmem:[#allocation2 + $0x68] sm:$0xff]
    %v966 = vld [vmem:[#allocation2 + $0x70] sm:$0xff]
    %v967 = vld [vmem:[#allocation2 + $0x78] sm:$0xff]
    %968 = vmatprep.subr.mxu0 %v379
    %969 = vmatpush1.msra.mxu0 %v378
    %970 = vmatprep.subr.mxu0 %v383
    %971 = vmatpush1.msra.mxu0 %v382
    %972 = vmatprep.subr.mxu0 %v387
    %973 = vmatpush1.msra.mxu0 %v386
    %974 = vmatprep.subr.mxu0 %v391
    %975 = vmatpush1.msra.mxu0 %v390
    %976 = vmatprep.subr.mxu0 %v395
    %977 = vmatpush1.msra.mxu0 %v394
    %978 = vmatprep.subr.mxu0 %v399
    %979 = vmatpush1.msra.mxu0 %v398
    %980 = vmatprep.subr.mxu0 %v403
    %981 = vmatpush1.msra.mxu0 %v402
    %982 = vmatprep.subr.mxu0 %v407
    %983 = vmatpush1.msra.mxu0 %v406
    %984 = vmatprep.subr.mxu0 %v411
    %985 = vmatpush1.msra.mxu0 %v410
    %986 = vmatprep.subr.mxu0 %v415
    %987 = vmatpush1.msra.mxu0 %v414
    %988 = vmatprep.subr.mxu0 %v419
    %989 = vmatpush1.msra.mxu0 %v418
    %990 = vmatprep.subr.mxu0 %v423
    %991 = vmatpush1.msra.mxu0 %v422
    %992 = vmatprep.subr.mxu0 %v427
    %993 = vmatpush1.msra.mxu0 %v426
    %994 = vmatprep.subr.mxu0 %v431
    %995 = vmatpush1.msra.mxu0 %v430
    %996 = vmatprep.subr.mxu0 %v435
    %997 = vmatpush1.msra.mxu0 %v434
    %998 = vmatprep.subr.mxu0 %v439
    %999 = vmatpush1.msra.mxu0 %v438
    %1000 = vmatprep.subr.mxu0 0.0
    %1001 = vmatpush1.msra.mxu0 0.0
    %1002 = vmatprep.subr.mxu0 0.0
    %1003 = vmatpush1.msra.mxu0 0.0
    %1004 = vmatprep.subr.mxu0 0.0
    %1005 = vmatpush1.msra.mxu0 0.0
    %1006 = vmatprep.subr.mxu0 0.0
    %1007 = vmatpush1.msra.mxu0 0.0
    %1008 = vmatprep.subr.mxu0 0.0
    %1009 = vmatpush1.msra.mxu0 0.0
    %1010 = vmatprep.subr.mxu0 0.0
    %1011 = vmatpush1.msra.mxu0 0.0
    %1012 = vmatprep.subr.mxu0 0.0
    %1013 = vmatpush1.msra.mxu0 0.0
    %1014 = vmatprep.subr.mxu0 0.0
    %1015 = vmatpush1.msra.mxu0 0.0
    %1016 = vmatprep.subr.mxu0 0.0
    %1017 = vmatpush1.msra.mxu0 0.0
    %1018 = vmatprep.subr.mxu0 0.0
    %1019 = vmatpush1.msra.mxu0 0.0
    %1020 = vmatprep.subr.mxu0 0.0
    %1021 = vmatpush1.msra.mxu0 0.0
    %1022 = vmatprep.subr.mxu0 0.0
    %1023 = vmatpush1.msra.mxu0 0.0
    %1024 = vmatprep.subr.mxu0 0.0
    %1025 = vmatpush1.msra.mxu0 0.0
    %1026 = vmatprep.subr.mxu0 0.0
    %1027 = vmatpush1.msra.mxu0 0.0
    %1028 = vmatprep.subr.mxu0 0.0
    %1029 = vmatpush1.msra.mxu0 0.0
    %1030 = vmatprep.subr.mxu0 0.0
    %1031 = vmatpush1.msra.mxu0 0.0
    %1032 = vmatprep.mubr.f32.mxu0 0.0
    %1033 = vmatmul.mubr.f32.gmra.mrb[0].mxu0 %v963
    %v1034 = vpop.f32.mrb[0].mxu0
    %v1035 = vadd.f32 0.0, %v1034
    %v1036 = vpop.f32.mrb[0].mxu0
    %v1037 = vadd.f32 0.0, %v1036
    %1038 = vdwg.mxu0
    %1039 = vmatprep.subr.mxu0 %v381
    %1040 = vmatpush1.msra.mxu0 %v380
    %1041 = vmatprep.subr.mxu0 %v385
    %1042 = vmatpush1.msra.mxu0 %v384
    %1043 = vmatprep.subr.mxu0 %v389
    %1044 = vmatpush1.msra.mxu0 %v388
    %1045 = vmatprep.subr.mxu0 %v393
    %1046 = vmatpush1.msra.mxu0 %v392
    %1047 = vmatprep.subr.mxu0 %v397
    %1048 = vmatpush1.msra.mxu0 %v396
    %1049 = vmatprep.subr.mxu0 %v401
    %1050 = vmatpush1.msra.mxu0 %v400
    %1051 = vmatprep.subr.mxu0 %v405
    %1052 = vmatpush1.msra.mxu0 %v404
    %1053 = vmatprep.subr.mxu0 %v409
    %1054 = vmatpush1.msra.mxu0 %v408
    %1055 = vmatprep.subr.mxu0 %v413
    %1056 = vmatpush1.msra.mxu0 %v412
    %1057 = vmatprep.subr.mxu0 %v417
    %1058 = vmatpush1.msra.mxu0 %v416
    %1059 = vmatprep.subr.mxu0 %v421
    %1060 = vmatpush1.msra.mxu0 %v420
    %1061 = vmatprep.subr.mxu0 %v425
    %1062 = vmatpush1.msra.mxu0 %v424
    %1063 = vmatprep.subr.mxu0 %v429
    %1064 = vmatpush1.msra.mxu0 %v428
    %1065 = vmatprep.subr.mxu0 %v433
    %1066 = vmatpush1.msra.mxu0 %v432
    %1067 = vmatprep.subr.mxu0 %v437
    %1068 = vmatpush1.msra.mxu0 %v436
    %1069 = vmatprep.subr.mxu0 %v441
    %1070 = vmatpush1.msra.mxu0 %v440
    %1071 = vmatprep.subr.mxu0 0.0
    %1072 = vmatpush1.msra.mxu0 0.0
    %1073 = vmatprep.subr.mxu0 0.0
    %1074 = vmatpush1.msra.mxu0 0.0
    %1075 = vmatprep.subr.mxu0 0.0
    %1076 = vmatpush1.msra.mxu0 0.0
    %1077 = vmatprep.subr.mxu0 0.0
    %1078 = vmatpush1.msra.mxu0 0.0
    %1079 = vmatprep.subr.mxu0 0.0
    %1080 = vmatpush1.msra.mxu0 0.0
    %1081 = vmatprep.subr.mxu0 0.0
    %1082 = vmatpush1.msra.mxu0 0.0
    %1083 = vmatprep.subr.mxu0 0.0
    %1084 = vmatpush1.msra.mxu0 0.0
    %1085 = vmatprep.subr.mxu0 0.0
    %1086 = vmatpush1.msra.mxu0 0.0
    %1087 = vmatprep.subr.mxu0 0.0
    %1088 = vmatpush1.msra.mxu0 0.0
    %1089 = vmatprep.subr.mxu0 0.0
    %1090 = vmatpush1.msra.mxu0 0.0
    %1091 = vmatprep.subr.mxu0 0.0
    %1092 = vmatpush1.msra.mxu0 0.0
    %1093 = vmatprep.subr.mxu0 0.0
    %1094 = vmatpush1.msra.mxu0 0.0
    %1095 = vmatprep.subr.mxu0 0.0
    %1096 = vmatpush1.msra.mxu0 0.0
    %1097 = vmatprep.subr.mxu0 0.0
    %1098 = vmatpush1.msra.mxu0 0.0
    %1099 = vmatprep.subr.mxu0 0.0
    %1100 = vmatpush1.msra.mxu0 0.0
    %1101 = vmatprep.subr.mxu0 0.0
    %1102 = vmatpush1.msra.mxu0 0.0
    %1103 = vmatprep.mubr.f32.mxu0 0.0
    %1104 = vmatmul.mubr.f32.gmra.mrb[0].mxu0 %v963
    %v1105 = vpop.f32.mrb[0].mxu0
    %v1106 = vadd.f32 0.0, %v1105
    %v1107 = vpop.f32.mrb[0].mxu0
    %v1108 = vadd.f32 0.0, %v1107
    %1109 = vdwg.mxu0
    %v1110 = vadd.f32 %v964, %v1035
    %v1111 = vadd.f32 %v965, %v1037
    %v1112 = vadd.f32 %v966, %v1106
    %v1113 = vadd.f32 %v967, %v1108
    %v1114 = vxor.u32 %v1110, 2147483648
    %v1115 = vxor.u32 %v1111, 2147483648
    %v1116 = vxor.u32 %v1112, 2147483648
    %v1117 = vmul.f32 %v1114, 1.442695
    %v1118 = vpow.pop %v1117
    %v1119 = vmul.f32 %v1115, 1.442695
    %v1120 = vpow.pop %v1119
    %v1121 = vmul.f32 %v1116, 1.442695
    %v1122 = vpow.pop %v1121
    %v1123 = vadd.f32 %v1118, 1.0
    %v1124 = vadd.f32 %v1120, 1.0
    %v1125 = vadd.f32 %v1122, 1.0
    %v1126 = vrcp.pop %v1123
    %v1127 = vmul.f32 1.0, %v1126
    %v1128 = vrcp.pop %v1124
    %v1129 = vmul.f32 1.0, %v1128
    %v1130 = vrcp.pop %v1125
    %v1131 = vmul.f32 1.0, %v1130
    %v1132 = vtanh.pop %v1113
    %v1133 = vmul.f32 %v1129, %v961
    %v1134 = vmul.f32 %v1127, %v1132
    %v1135 = vadd.f32 %v1133, %v1134
    %v1136 = vtanh.pop %v1135
    %v1137 = vmul.f32 %v1131, %v1136
    %v1138 = vld [vmem:[#allocation2 + $0x80] sm:$0xff]
    %v1139 = vld [vmem:[#allocation2 + $0x88] sm:$0xff]
    %v1140 = vld [vmem:[#allocation2 + $0x90] sm:$0xff]
    %v1141 = vld [vmem:[#allocation2 + $0x98] sm:$0xff]
    %1142 = vmatprep.subr.mxu0 %v379
    %1143 = vmatpush1.msra.mxu0 %v378
    %1144 = vmatprep.subr.mxu0 %v383
    %1145 = vmatpush1.msra.mxu0 %v382
    %1146 = vmatprep.subr.mxu0 %v387
    %1147 = vmatpush1.msra.mxu0 %v386
    %1148 = vmatprep.subr.mxu0 %v391
    %1149 = vmatpush1.msra.mxu0 %v390
    %1150 = vmatprep.subr.mxu0 %v395
    %1151 = vmatpush1.msra.mxu0 %v394
    %1152 = vmatprep.subr.mxu0 %v399
    %1153 = vmatpush1.msra.mxu0 %v398
    %1154 = vmatprep.subr.mxu0 %v403
    %1155 = vmatpush1.msra.mxu0 %v402
    %1156 = vmatprep.subr.mxu0 %v407
    %1157 = vmatpush1.msra.mxu0 %v406
    %1158 = vmatprep.subr.mxu0 %v411
    %1159 = vmatpush1.msra.mxu0 %v410
    %1160 = vmatprep.subr.mxu0 %v415
    %1161 = vmatpush1.msra.mxu0 %v414
    %1162 = vmatprep.subr.mxu0 %v419
    %1163 = vmatpush1.msra.mxu0 %v418
    %1164 = vmatprep.subr.mxu0 %v423
    %1165 = vmatpush1.msra.mxu0 %v422
    %1166 = vmatprep.subr.mxu0 %v427
    %1167 = vmatpush1.msra.mxu0 %v426
    %1168 = vmatprep.subr.mxu0 %v431
    %1169 = vmatpush1.msra.mxu0 %v430
    %1170 = vmatprep.subr.mxu0 %v435
    %1171 = vmatpush1.msra.mxu0 %v434
    %1172 = vmatprep.subr.mxu0 %v439
    %1173 = vmatpush1.msra.mxu0 %v438
    %1174 = vmatprep.subr.mxu0 0.0
    %1175 = vmatpush1.msra.mxu0 0.0
    %1176 = vmatprep.subr.mxu0 0.0
    %1177 = vmatpush1.msra.mxu0 0.0
    %1178 = vmatprep.subr.mxu0 0.0
    %1179 = vmatpush1.msra.mxu0 0.0
    %1180 = vmatprep.subr.mxu0 0.0
    %1181 = vmatpush1.msra.mxu0 0.0
    %1182 = vmatprep.subr.mxu0 0.0
    %1183 = vmatpush1.msra.mxu0 0.0
    %1184 = vmatprep.subr.mxu0 0.0
    %1185 = vmatpush1.msra.mxu0 0.0
    %1186 = vmatprep.subr.mxu0 0.0
    %1187 = vmatpush1.msra.mxu0 0.0
    %1188 = vmatprep.subr.mxu0 0.0
    %1189 = vmatpush1.msra.mxu0 0.0
    %1190 = vmatprep.subr.mxu0 0.0
    %1191 = vmatpush1.msra.mxu0 0.0
    %1192 = vmatprep.subr.mxu0 0.0
    %1193 = vmatpush1.msra.mxu0 0.0
    %1194 = vmatprep.subr.mxu0 0.0
    %1195 = vmatpush1.msra.mxu0 0.0
    %1196 = vmatprep.subr.mxu0 0.0
    %1197 = vmatpush1.msra.mxu0 0.0
    %1198 = vmatprep.subr.mxu0 0.0
    %1199 = vmatpush1.msra.mxu0 0.0
    %1200 = vmatprep.subr.mxu0 0.0
    %1201 = vmatpush1.msra.mxu0 0.0
    %1202 = vmatprep.subr.mxu0 0.0
    %1203 = vmatpush1.msra.mxu0 0.0
    %1204 = vmatprep.subr.mxu0 0.0
    %1205 = vmatpush1.msra.mxu0 0.0
    %1206 = vmatprep.mubr.f32.mxu0 0.0
    %1207 = vmatmul.mubr.f32.gmra.mrb[0].mxu0 %v1137
    %v1208 = vpop.f32.mrb[0].mxu0
    %v1209 = vadd.f32 0.0, %v1208
    %v1210 = vpop.f32.mrb[0].mxu0
    %v1211 = vadd.f32 0.0, %v1210
    %1212 = vdwg.mxu0
    %1213 = vmatprep.subr.mxu0 %v381
    %1214 = vmatpush1.msra.mxu0 %v380
    %1215 = vmatprep.subr.mxu0 %v385
    %1216 = vmatpush1.msra.mxu0 %v384
    %1217 = vmatprep.subr.mxu0 %v389
    %1218 = vmatpush1.msra.mxu0 %v388
    %1219 = vmatprep.subr.mxu0 %v393
    %1220 = vmatpush1.msra.mxu0 %v392
    %1221 = vmatprep.subr.mxu0 %v397
    %1222 = vmatpush1.msra.mxu0 %v396
    %1223 = vmatprep.subr.mxu0 %v401
    %1224 = vmatpush1.msra.mxu0 %v400
    %1225 = vmatprep.subr.mxu0 %v405
    %1226 = vmatpush1.msra.mxu0 %v404
    %1227 = vmatprep.subr.mxu0 %v409
    %1228 = vmatpush1.msra.mxu0 %v408
    %1229 = vmatprep.subr.mxu0 %v413
    %1230 = vmatpush1.msra.mxu0 %v412
    %1231 = vmatprep.subr.mxu0 %v417
    %1232 = vmatpush1.msra.mxu0 %v416
    %1233 = vmatprep.subr.mxu0 %v421
    %1234 = vmatpush1.msra.mxu0 %v420
    %1235 = vmatprep.subr.mxu0 %v425
    %1236 = vmatpush1.msra.mxu0 %v424
    %1237 = vmatprep.subr.mxu0 %v429
    %1238 = vmatpush1.msra.mxu0 %v428
    %1239 = vmatprep.subr.mxu0 %v433
    %1240 = vmatpush1.msra.mxu0 %v432
    %1241 = vmatprep.subr.mxu0 %v437
    %1242 = vmatpush1.msra.mxu0 %v436
    %1243 = vmatprep.subr.mxu0 %v441
    %1244 = vmatpush1.msra.mxu0 %v440
    %1245 = vmatprep.subr.mxu0 0.0
    %1246 = vmatpush1.msra.mxu0 0.0
    %1247 = vmatprep.subr.mxu0 0.0
    %1248 = vmatpush1.msra.mxu0 0.0
    %1249 = vmatprep.subr.mxu0 0.0
    %1250 = vmatpush1.msra.mxu0 0.0
    %1251 = vmatprep.subr.mxu0 0.0
    %1252 = vmatpush1.msra.mxu0 0.0
    %1253 = vmatprep.subr.mxu0 0.0
    %1254 = vmatpush1.msra.mxu0 0.0
    %1255 = vmatprep.subr.mxu0 0.0
    %1256 = vmatpush1.msra.mxu0 0.0
    %1257 = vmatprep.subr.mxu0 0.0
    %1258 = vmatpush1.msra.mxu0 0.0
    %1259 = vmatprep.subr.mxu0 0.0
    %1260 = vmatpush1.msra.mxu0 0.0
    %1261 = vmatprep.subr.mxu0 0.0
    %1262 = vmatpush1.msra.mxu0 0.0
    %1263 = vmatprep.subr.mxu0 0.0
    %1264 = vmatpush1.msra.mxu0 0.0
    %1265 = vmatprep.subr.mxu0 0.0
    %1266 = vmatpush1.msra.mxu0 0.0
    %1267 = vmatprep.subr.mxu0 0.0
    %1268 = vmatpush1.msra.mxu0 0.0
    %1269 = vmatprep.subr.mxu0 0.0
    %1270 = vmatpush1.msra.mxu0 0.0
    %1271 = vmatprep.subr.mxu0 0.0
    %1272 = vmatpush1.msra.mxu0 0.0
    %1273 = vmatprep.subr.mxu0 0.0
    %1274 = vmatpush1.msra.mxu0 0.0
    %1275 = vmatprep.subr.mxu0 0.0
    %1276 = vmatpush1.msra.mxu0 0.0
    %1277 = vmatprep.mubr.f32.mxu0 0.0
    %1278 = vmatmul.mubr.f32.gmra.mrb[0].mxu0 %v1137
    %v1279 = vpop.f32.mrb[0].mxu0
    %v1280 = vadd.f32 0.0, %v1279
    %v1281 = vpop.f32.mrb[0].mxu0
    %v1282 = vadd.f32 0.0, %v1281
    %1283 = vdwg.mxu0
    %v1284 = vadd.f32 %v1138, %v1209
    %v1285 = vadd.f32 %v1139, %v1211
    %v1286 = vadd.f32 %v1140, %v1280
    %v1287 = vadd.f32 %v1141, %v1282
    %v1288 = vxor.u32 %v1284, 2147483648
    %v1289 = vxor.u32 %v1285, 2147483648
    %v1290 = vxor.u32 %v1286, 2147483648
    %v1291 = vmul.f32 %v1288, 1.442695
    %v1292 = vpow.pop %v1291
    %v1293 = vmul.f32 %v1289, 1.442695
    %v1294 = vpow.pop %v1293
    %v1295 = vmul.f32 %v1290, 1.442695
    %v1296 = vpow.pop %v1295
    %v1297 = vadd.f32 %v1292, 1.0
    %v1298 = vadd.f32 %v1294, 1.0
    %v1299 = vadd.f32 %v1296, 1.0
    %v1300 = vrcp.pop %v1297
    %v1301 = vmul.f32 1.0, %v1300
    %v1302 = vrcp.pop %v1298
    %v1303 = vmul.f32 1.0, %v1302
    %v1304 = vrcp.pop %v1299
    %v1305 = vmul.f32 1.0, %v1304
    %v1306 = vtanh.pop %v1287
    %v1307 = vmul.f32 %v1303, %v1135
    %v1308 = vmul.f32 %v1301, %v1306
    %v1309 = vadd.f32 %v1307, %v1308
    %v1310 = vtanh.pop %v1309
    %v1311 = vmul.f32 %v1305, %v1310
    %v1312 = vld [vmem:[#allocation2 + $0xa0] sm:$0xff]
    %v1313 = vld [vmem:[#allocation2 + $0xa8] sm:$0xff]
    %v1314 = vld [vmem:[#allocation2 + $0xb0] sm:$0xff]
    %v1315 = vld [vmem:[#allocation2 + $0xb8] sm:$0xff]
    %1316 = vmatprep.subr.mxu0 %v379
    %1317 = vmatpush1.msra.mxu0 %v378
    %1318 = vmatprep.subr.mxu0 %v383
    %1319 = vmatpush1.msra.mxu0 %v382
    %1320 = vmatprep.subr.mxu0 %v387
    %1321 = vmatpush1.msra.mxu0 %v386
    %1322 = vmatprep.subr.mxu0 %v391
    %1323 = vmatpush1.msra.mxu0 %v390
    %1324 = vmatprep.subr.mxu0 %v395
    %1325 = vmatpush1.msra.mxu0 %v394
    %1326 = vmatprep.subr.mxu0 %v399
    %1327 = vmatpush1.msra.mxu0 %v398
    %1328 = vmatprep.subr.mxu0 %v403
    %1329 = vmatpush1.msra.mxu0 %v402
    %1330 = vmatprep.subr.mxu0 %v407
    %1331 = vmatpush1.msra.mxu0 %v406
    %1332 = vmatprep.subr.mxu0 %v411
    %1333 = vmatpush1.msra.mxu0 %v410
    %1334 = vmatprep.subr.mxu0 %v415
    %1335 = vmatpush1.msra.mxu0 %v414
    %1336 = vmatprep.subr.mxu0 %v419
    %1337 = vmatpush1.msra.mxu0 %v418
    %1338 = vmatprep.subr.mxu0 %v423
    %1339 = vmatpush1.msra.mxu0 %v422
    %1340 = vmatprep.subr.mxu0 %v427
    %1341 = vmatpush1.msra.mxu0 %v426
    %1342 = vmatprep.subr.mxu0 %v431
    %1343 = vmatpush1.msra.mxu0 %v430
    %1344 = vmatprep.subr.mxu0 %v435
    %1345 = vmatpush1.msra.mxu0 %v434
    %1346 = vmatprep.subr.mxu0 %v439
    %1347 = vmatpush1.msra.mxu0 %v438
    %1348 = vmatprep.subr.mxu0 0.0
    %1349 = vmatpush1.msra.mxu0 0.0
    %1350 = vmatprep.subr.mxu0 0.0
    %1351 = vmatpush1.msra.mxu0 0.0
    %1352 = vmatprep.subr.mxu0 0.0
    %1353 = vmatpush1.msra.mxu0 0.0
    %1354 = vmatprep.subr.mxu0 0.0
    %1355 = vmatpush1.msra.mxu0 0.0
    %1356 = vmatprep.subr.mxu0 0.0
    %1357 = vmatpush1.msra.mxu0 0.0
    %1358 = vmatprep.subr.mxu0 0.0
    %1359 = vmatpush1.msra.mxu0 0.0
    %1360 = vmatprep.subr.mxu0 0.0
    %1361 = vmatpush1.msra.mxu0 0.0
    %1362 = vmatprep.subr.mxu0 0.0
    %1363 = vmatpush1.msra.mxu0 0.0
    %1364 = vmatprep.subr.mxu0 0.0
    %1365 = vmatpush1.msra.mxu0 0.0
    %1366 = vmatprep.subr.mxu0 0.0
    %1367 = vmatpush1.msra.mxu0 0.0
    %1368 = vmatprep.subr.mxu0 0.0
    %1369 = vmatpush1.msra.mxu0 0.0
    %1370 = vmatprep.subr.mxu0 0.0
    %1371 = vmatpush1.msra.mxu0 0.0
    %1372 = vmatprep.subr.mxu0 0.0
    %1373 = vmatpush1.msra.mxu0 0.0
    %1374 = vmatprep.subr.mxu0 0.0
    %1375 = vmatpush1.msra.mxu0 0.0
    %1376 = vmatprep.subr.mxu0 0.0
    %1377 = vmatpush1.msra.mxu0 0.0
    %1378 = vmatprep.subr.mxu0 0.0
    %1379 = vmatpush1.msra.mxu0 0.0
    %1380 = vmatprep.mubr.f32.mxu0 0.0
    %1381 = vmatmul.mubr.f32.gmra.mrb[0].mxu0 %v1311
    %v1382 = vpop.f32.mrb[0].mxu0
    %v1383 = vadd.f32 0.0, %v1382
    %v1384 = vpop.f32.mrb[0].mxu0
    %v1385 = vadd.f32 0.0, %v1384
    %1386 = vdwg.mxu0
    %1387 = vmatprep.subr.mxu0 %v381
    %1388 = vmatpush1.msra.mxu0 %v380
    %1389 = vmatprep.subr.mxu0 %v385
    %1390 = vmatpush1.msra.mxu0 %v384
    %1391 = vmatprep.subr.mxu0 %v389
    %1392 = vmatpush1.msra.mxu0 %v388
    %1393 = vmatprep.subr.mxu0 %v393
    %1394 = vmatpush1.msra.mxu0 %v392
    %1395 = vmatprep.subr.mxu0 %v397
    %1396 = vmatpush1.msra.mxu0 %v396
    %1397 = vmatprep.subr.mxu0 %v401
    %1398 = vmatpush1.msra.mxu0 %v400
    %1399 = vmatprep.subr.mxu0 %v405
    %1400 = vmatpush1.msra.mxu0 %v404
    %1401 = vmatprep.subr.mxu0 %v409
    %1402 = vmatpush1.msra.mxu0 %v408
    %1403 = vmatprep.subr.mxu0 %v413
    %1404 = vmatpush1.msra.mxu0 %v412
    %1405 = vmatprep.subr.mxu0 %v417
    %1406 = vmatpush1.msra.mxu0 %v416
    %1407 = vmatprep.subr.mxu0 %v421
    %1408 = vmatpush1.msra.mxu0 %v420
    %1409 = vmatprep.subr.mxu0 %v425
    %1410 = vmatpush1.msra.mxu0 %v424
    %1411 = vmatprep.subr.mxu0 %v429
    %1412 = vmatpush1.msra.mxu0 %v428
    %1413 = vmatprep.subr.mxu0 %v433
    %1414 = vmatpush1.msra.mxu0 %v432
    %1415 = vmatprep.subr.mxu0 %v437
    %1416 = vmatpush1.msra.mxu0 %v436
    %1417 = vmatprep.subr.mxu0 %v441
    %1418 = vmatpush1.msra.mxu0 %v440
    %1419 = vmatprep.subr.mxu0 0.0
    %1420 = vmatpush1.msra.mxu0 0.0
    %1421 = vmatprep.subr.mxu0 0.0
    %1422 = vmatpush1.msra.mxu0 0.0
    %1423 = vmatprep.subr.mxu0 0.0
    %1424 = vmatpush1.msra.mxu0 0.0
    %1425 = vmatprep.subr.mxu0 0.0
    %1426 = vmatpush1.msra.mxu0 0.0
    %1427 = vmatprep.subr.mxu0 0.0
    %1428 = vmatpush1.msra.mxu0 0.0
    %1429 = vmatprep.subr.mxu0 0.0
    %1430 = vmatpush1.msra.mxu0 0.0
    %1431 = vmatprep.subr.mxu0 0.0
    %1432 = vmatpush1.msra.mxu0 0.0
    %1433 = vmatprep.subr.mxu0 0.0
    %1434 = vmatpush1.msra.mxu0 0.0
    %1435 = vmatprep.subr.mxu0 0.0
    %1436 = vmatpush1.msra.mxu0 0.0
    %1437 = vmatprep.subr.mxu0 0.0
    %1438 = vmatpush1.msra.mxu0 0.0
    %1439 = vmatprep.subr.mxu0 0.0
    %1440 = vmatpush1.msra.mxu0 0.0
    %1441 = vmatprep.subr.mxu0 0.0
    %1442 = vmatpush1.msra.mxu0 0.0
    %1443 = vmatprep.subr.mxu0 0.0
    %1444 = vmatpush1.msra.mxu0 0.0
    %1445 = vmatprep.subr.mxu0 0.0
    %1446 = vmatpush1.msra.mxu0 0.0
    %1447 = vmatprep.subr.mxu0 0.0
    %1448 = vmatpush1.msra.mxu0 0.0
    %1449 = vmatprep.subr.mxu0 0.0
    %1450 = vmatpush1.msra.mxu0 0.0
    %1451 = vmatprep.mubr.f32.mxu0 0.0
    %1452 = vmatmul.mubr.f32.gmra.mrb[0].mxu0 %v1311
    %v1453 = vpop.f32.mrb[0].mxu0
    %v1454 = vadd.f32 0.0, %v1453
    %v1455 = vpop.f32.mrb[0].mxu0
    %v1456 = vadd.f32 0.0, %v1455
    %1457 = vdwg.mxu0
    %v1458 = vadd.f32 %v1312, %v1383
    %v1459 = vadd.f32 %v1313, %v1385
    %v1460 = vadd.f32 %v1314, %v1454
    %v1461 = vadd.f32 %v1315, %v1456
    %v1462 = vxor.u32 %v1458, 2147483648
    %v1463 = vxor.u32 %v1459, 2147483648
    %v1464 = vxor.u32 %v1460, 2147483648
    %v1465 = vmul.f32 %v1462, 1.442695
    %v1466 = vpow.pop %v1465
    %v1467 = vmul.f32 %v1463, 1.442695
    %v1468 = vpow.pop %v1467
    %v1469 = vmul.f32 %v1464, 1.442695
    %v1470 = vpow.pop %v1469
    %v1471 = vadd.f32 %v1466, 1.0
    %v1472 = vadd.f32 %v1468, 1.0
    %v1473 = vadd.f32 %v1470, 1.0
    %v1474 = vrcp.pop %v1471
    %v1475 = vmul.f32 1.0, %v1474
    %v1476 = vrcp.pop %v1472
    %v1477 = vmul.f32 1.0, %v1476
    %v1478 = vrcp.pop %v1473
    %v1479 = vmul.f32 1.0, %v1478
    %v1480 = vtanh.pop %v1461
    %v1481 = vmul.f32 %v1477, %v1309
    %v1482 = vmul.f32 %v1475, %v1480
    %v1483 = vadd.f32 %v1481, %v1482
    %v1484 = vtanh.pop %v1483
    %v1485 = vmul.f32 %v1479, %v1484
    %v1486 = vld [vmem:[#allocation2 + $0xc0] sm:$0xff]
    %v1487 = vld [vmem:[#allocation2 + $0xc8] sm:$0xff]
    %v1488 = vld [vmem:[#allocation2 + $0xd0] sm:$0xff]
    %v1489 = vld [vmem:[#allocation2 + $0xd8] sm:$0xff]
    %1490 = vmatprep.subr.mxu0 %v379
    %1491 = vmatpush1.msra.mxu0 %v378
    %1492 = vmatprep.subr.mxu0 %v383
    %1493 = vmatpush1.msra.mxu0 %v382
    %1494 = vmatprep.subr.mxu0 %v387
    %1495 = vmatpush1.msra.mxu0 %v386
    %1496 = vmatprep.subr.mxu0 %v391
    %1497 = vmatpush1.msra.mxu0 %v390
    %1498 = vmatprep.subr.mxu0 %v395
    %1499 = vmatpush1.msra.mxu0 %v394
    %1500 = vmatprep.subr.mxu0 %v399
    %1501 = vmatpush1.msra.mxu0 %v398
    %1502 = vmatprep.subr.mxu0 %v403
    %1503 = vmatpush1.msra.mxu0 %v402
    %1504 = vmatprep.subr.mxu0 %v407
    %1505 = vmatpush1.msra.mxu0 %v406
    %1506 = vmatprep.subr.mxu0 %v411
    %1507 = vmatpush1.msra.mxu0 %v410
    %1508 = vmatprep.subr.mxu0 %v415
    %1509 = vmatpush1.msra.mxu0 %v414
    %1510 = vmatprep.subr.mxu0 %v419
    %1511 = vmatpush1.msra.mxu0 %v418
    %1512 = vmatprep.subr.mxu0 %v423
    %1513 = vmatpush1.msra.mxu0 %v422
    %1514 = vmatprep.subr.mxu0 %v427
    %1515 = vmatpush1.msra.mxu0 %v426
    %1516 = vmatprep.subr.mxu0 %v431
    %1517 = vmatpush1.msra.mxu0 %v430
    %1518 = vmatprep.subr.mxu0 %v435
    %1519 = vmatpush1.msra.mxu0 %v434
    %1520 = vmatprep.subr.mxu0 %v439
    %1521 = vmatpush1.msra.mxu0 %v438
    %1522 = vmatprep.subr.mxu0 0.0
    %1523 = vmatpush1.msra.mxu0 0.0
    %1524 = vmatprep.subr.mxu0 0.0
    %1525 = vmatpush1.msra.mxu0 0.0
    %1526 = vmatprep.subr.mxu0 0.0
    %1527 = vmatpush1.msra.mxu0 0.0
    %1528 = vmatprep.subr.mxu0 0.0
    %1529 = vmatpush1.msra.mxu0 0.0
    %1530 = vmatprep.subr.mxu0 0.0
    %1531 = vmatpush1.msra.mxu0 0.0
    %1532 = vmatprep.subr.mxu0 0.0
    %1533 = vmatpush1.msra.mxu0 0.0
    %1534 = vmatprep.subr.mxu0 0.0
    %1535 = vmatpush1.msra.mxu0 0.0
    %1536 = vmatprep.subr.mxu0 0.0
    %1537 = vmatpush1.msra.mxu0 0.0
    %1538 = vmatprep.subr.mxu0 0.0
    %1539 = vmatpush1.msra.mxu0 0.0
    %1540 = vmatprep.subr.mxu0 0.0
    %1541 = vmatpush1.msra.mxu0 0.0
    %1542 = vmatprep.subr.mxu0 0.0
    %1543 = vmatpush1.msra.mxu0 0.0
    %1544 = vmatprep.subr.mxu0 0.0
    %1545 = vmatpush1.msra.mxu0 0.0
    %1546 = vmatprep.subr.mxu0 0.0
    %1547 = vmatpush1.msra.mxu0 0.0
    %1548 = vmatprep.subr.mxu0 0.0
    %1549 = vmatpush1.msra.mxu0 0.0
    %1550 = vmatprep.subr.mxu0 0.0
    %1551 = vmatpush1.msra.mxu0 0.0
    %1552 = vmatprep.subr.mxu0 0.0
    %1553 = vmatpush1.msra.mxu0 0.0
    %1554 = vmatprep.mubr.f32.mxu0 0.0
    %1555 = vmatmul.mubr.f32.gmra.mrb[0].mxu0 %v1485
    %v1556 = vpop.f32.mrb[0].mxu0
    %v1557 = vadd.f32 0.0, %v1556
    %v1558 = vpop.f32.mrb[0].mxu0
    %v1559 = vadd.f32 0.0, %v1558
    %1560 = vdwg.mxu0
    %1561 = vmatprep.subr.mxu0 %v381
    %1562 = vmatpush1.msra.mxu0 %v380
    %1563 = vmatprep.subr.mxu0 %v385
    %1564 = vmatpush1.msra.mxu0 %v384
    %1565 = vmatprep.subr.mxu0 %v389
    %1566 = vmatpush1.msra.mxu0 %v388
    %1567 = vmatprep.subr.mxu0 %v393
    %1568 = vmatpush1.msra.mxu0 %v392
    %1569 = vmatprep.subr.mxu0 %v397
    %1570 = vmatpush1.msra.mxu0 %v396
    %1571 = vmatprep.subr.mxu0 %v401
    %1572 = vmatpush1.msra.mxu0 %v400
    %1573 = vmatprep.subr.mxu0 %v405
    %1574 = vmatpush1.msra.mxu0 %v404
    %1575 = vmatprep.subr.mxu0 %v409
    %1576 = vmatpush1.msra.mxu0 %v408
    %1577 = vmatprep.subr.mxu0 %v413
    %1578 = vmatpush1.msra.mxu0 %v412
    %1579 = vmatprep.subr.mxu0 %v417
    %1580 = vmatpush1.msra.mxu0 %v416
    %1581 = vmatprep.subr.mxu0 %v421
    %1582 = vmatpush1.msra.mxu0 %v420
    %1583 = vmatprep.subr.mxu0 %v425
    %1584 = vmatpush1.msra.mxu0 %v424
    %1585 = vmatprep.subr.mxu0 %v429
    %1586 = vmatpush1.msra.mxu0 %v428
    %1587 = vmatprep.subr.mxu0 %v433
    %1588 = vmatpush1.msra.mxu0 %v432
    %1589 = vmatprep.subr.mxu0 %v437
    %1590 = vmatpush1.msra.mxu0 %v436
    %1591 = vmatprep.subr.mxu0 %v441
    %1592 = vmatpush1.msra.mxu0 %v440
    %1593 = vmatprep.subr.mxu0 0.0
    %1594 = vmatpush1.msra.mxu0 0.0
    %1595 = vmatprep.subr.mxu0 0.0
    %1596 = vmatpush1.msra.mxu0 0.0
    %1597 = vmatprep.subr.mxu0 0.0
    %1598 = vmatpush1.msra.mxu0 0.0
    %1599 = vmatprep.subr.mxu0 0.0
    %1600 = vmatpush1.msra.mxu0 0.0
    %1601 = vmatprep.subr.mxu0 0.0
    %1602 = vmatpush1.msra.mxu0 0.0
    %1603 = vmatprep.subr.mxu0 0.0
    %1604 = vmatpush1.msra.mxu0 0.0
    %1605 = vmatprep.subr.mxu0 0.0
    %1606 = vmatpush1.msra.mxu0 0.0
    %1607 = vmatprep.subr.mxu0 0.0
    %1608 = vmatpush1.msra.mxu0 0.0
    %1609 = vmatprep.subr.mxu0 0.0
    %1610 = vmatpush1.msra.mxu0 0.0
    %1611 = vmatprep.subr.mxu0 0.0
    %1612 = vmatpush1.msra.mxu0 0.0
    %1613 = vmatprep.subr.mxu0 0.0
    %1614 = vmatpush1.msra.mxu0 0.0
    %1615 = vmatprep.subr.mxu0 0.0
    %1616 = vmatpush1.msra.mxu0 0.0
    %1617 = vmatprep.subr.mxu0 0.0
    %1618 = vmatpush1.msra.mxu0 0.0
    %1619 = vmatprep.subr.mxu0 0.0
    %1620 = vmatpush1.msra.mxu0 0.0
    %1621 = vmatprep.subr.mxu0 0.0
    %1622 = vmatpush1.msra.mxu0 0.0
    %1623 = vmatprep.subr.mxu0 0.0
    %1624 = vmatpush1.msra.mxu0 0.0
    %1625 = vmatprep.mubr.f32.mxu0 0.0
    %1626 = vmatmul.mubr.f32.gmra.mrb[0].mxu0 %v1485
    %v1627 = vpop.f32.mrb[0].mxu0
    %v1628 = vadd.f32 0.0, %v1627
    %v1629 = vpop.f32.mrb[0].mxu0
    %v1630 = vadd.f32 0.0, %v1629
    %1631 = vdwg.mxu0
    %v1632 = vadd.f32 %v1486, %v1557
    %v1633 = vadd.f32 %v1487, %v1559
    %v1634 = vadd.f32 %v1488, %v1628
    %v1635 = vadd.f32 %v1489, %v1630
    %v1636 = vxor.u32 %v1632, 2147483648
    %v1637 = vxor.u32 %v1633, 2147483648
    %v1638 = vxor.u32 %v1634, 2147483648
    %v1639 = vmul.f32 %v1636, 1.442695
    %v1640 = vpow.pop %v1639
    %v1641 = vmul.f32 %v1637, 1.442695
    %v1642 = vpow.pop %v1641
    %v1643 = vmul.f32 %v1638, 1.442695
    %v1644 = vpow.pop %v1643
    %v1645 = vadd.f32 %v1640, 1.0
    %v1646 = vadd.f32 %v1642, 1.0
    %v1647 = vadd.f32 %v1644, 1.0
    %v1648 = vrcp.pop %v1645
    %v1649 = vmul.f32 1.0, %v1648
    %v1650 = vrcp.pop %v1646
    %v1651 = vmul.f32 1.0, %v1650
    %v1652 = vrcp.pop %v1647
    %v1653 = vmul.f32 1.0, %v1652
    %v1654 = vtanh.pop %v1635
    %v1655 = vmul.f32 %v1651, %v1483
    %v1656 = vmul.f32 %v1649, %v1654
    %v1657 = vadd.f32 %v1655, %v1656
    %v1658 = vtanh.pop %v1657
    %v1659 = vmul.f32 %v1653, %v1658
    %v1660 = vld [vmem:[#allocation2 + $0xe0] sm:$0xff]
    %v1661 = vld [vmem:[#allocation2 + $0xe8] sm:$0xff]
    %v1662 = vld [vmem:[#allocation2 + $0xf0] sm:$0xff]
    %v1663 = vld [vmem:[#allocation2 + $0xf8] sm:$0xff]
    %1664 = vmatprep.subr.mxu0 %v379
    %1665 = vmatpush1.msra.mxu0 %v378
    %1666 = vmatprep.subr.mxu0 %v383
    %1667 = vmatpush1.msra.mxu0 %v382
    %1668 = vmatprep.subr.mxu0 %v387
    %1669 = vmatpush1.msra.mxu0 %v386
    %1670 = vmatprep.subr.mxu0 %v391
    %1671 = vmatpush1.msra.mxu0 %v390
    %1672 = vmatprep.subr.mxu0 %v395
    %1673 = vmatpush1.msra.mxu0 %v394
    %1674 = vmatprep.subr.mxu0 %v399
    %1675 = vmatpush1.msra.mxu0 %v398
    %1676 = vmatprep.subr.mxu0 %v403
    %1677 = vmatpush1.msra.mxu0 %v402
    %1678 = vmatprep.subr.mxu0 %v407
    %1679 = vmatpush1.msra.mxu0 %v406
    %1680 = vmatprep.subr.mxu0 %v411
    %1681 = vmatpush1.msra.mxu0 %v410
    %1682 = vmatprep.subr.mxu0 %v415
    %1683 = vmatpush1.msra.mxu0 %v414
    %1684 = vmatprep.subr.mxu0 %v419
    %1685 = vmatpush1.msra.mxu0 %v418
    %1686 = vmatprep.subr.mxu0 %v423
    %1687 = vmatpush1.msra.mxu0 %v422
    %1688 = vmatprep.subr.mxu0 %v427
    %1689 = vmatpush1.msra.mxu0 %v426
    %1690 = vmatprep.subr.mxu0 %v431
    %1691 = vmatpush1.msra.mxu0 %v430
    %1692 = vmatprep.subr.mxu0 %v435
    %1693 = vmatpush1.msra.mxu0 %v434
    %1694 = vmatprep.subr.mxu0 %v439
    %1695 = vmatpush1.msra.mxu0 %v438
    %1696 = vmatprep.subr.mxu0 0.0
    %1697 = vmatpush1.msra.mxu0 0.0
    %1698 = vmatprep.subr.mxu0 0.0
    %1699 = vmatpush1.msra.mxu0 0.0
    %1700 = vmatprep.subr.mxu0 0.0
    %1701 = vmatpush1.msra.mxu0 0.0
    %1702 = vmatprep.subr.mxu0 0.0
    %1703 = vmatpush1.msra.mxu0 0.0
    %1704 = vmatprep.subr.mxu0 0.0
    %1705 = vmatpush1.msra.mxu0 0.0
    %1706 = vmatprep.subr.mxu0 0.0
    %1707 = vmatpush1.msra.mxu0 0.0
    %1708 = vmatprep.subr.mxu0 0.0
    %1709 = vmatpush1.msra.mxu0 0.0
    %1710 = vmatprep.subr.mxu0 0.0
    %1711 = vmatpush1.msra.mxu0 0.0
    %1712 = vmatprep.subr.mxu0 0.0
    %1713 = vmatpush1.msra.mxu0 0.0
    %1714 = vmatprep.subr.mxu0 0.0
    %1715 = vmatpush1.msra.mxu0 0.0
    %1716 = vmatprep.subr.mxu0 0.0
    %1717 = vmatpush1.msra.mxu0 0.0
    %1718 = vmatprep.subr.mxu0 0.0
    %1719 = vmatpush1.msra.mxu0 0.0
    %1720 = vmatprep.subr.mxu0 0.0
    %1721 = vmatpush1.msra.mxu0 0.0
    %1722 = vmatprep.subr.mxu0 0.0
    %1723 = vmatpush1.msra.mxu0 0.0
    %1724 = vmatprep.subr.mxu0 0.0
    %1725 = vmatpush1.msra.mxu0 0.0
    %1726 = vmatprep.subr.mxu0 0.0
    %1727 = vmatpush1.msra.mxu0 0.0
    %1728 = vmatprep.mubr.f32.mxu0 0.0
    %1729 = vmatmul.mubr.f32.gmra.mrb[0].mxu0 %v1659
    %v1730 = vpop.f32.mrb[0].mxu0
    %v1731 = vadd.f32 0.0, %v1730
    %v1732 = vpop.f32.mrb[0].mxu0
    %v1733 = vadd.f32 0.0, %v1732
    %1734 = vdwg.mxu0
    %1735 = vmatprep.subr.mxu0 %v381
    %1736 = vmatpush1.msra.mxu0 %v380
    %1737 = vmatprep.subr.mxu0 %v385
    %1738 = vmatpush1.msra.mxu0 %v384
    %1739 = vmatprep.subr.mxu0 %v389
    %1740 = vmatpush1.msra.mxu0 %v388
    %1741 = vmatprep.subr.mxu0 %v393
    %1742 = vmatpush1.msra.mxu0 %v392
    %1743 = vmatprep.subr.mxu0 %v397
    %1744 = vmatpush1.msra.mxu0 %v396
    %1745 = vmatprep.subr.mxu0 %v401
    %1746 = vmatpush1.msra.mxu0 %v400
    %1747 = vmatprep.subr.mxu0 %v405
    %1748 = vmatpush1.msra.mxu0 %v404
    %1749 = vmatprep.subr.mxu0 %v409
    %1750 = vmatpush1.msra.mxu0 %v408
    %1751 = vmatprep.subr.mxu0 %v413
    %1752 = vmatpush1.msra.mxu0 %v412
    %1753 = vmatprep.subr.mxu0 %v417
    %1754 = vmatpush1.msra.mxu0 %v416
    %1755 = vmatprep.subr.mxu0 %v421
    %1756 = vmatpush1.msra.mxu0 %v420
    %1757 = vmatprep.subr.mxu0 %v425
    %1758 = vmatpush1.msra.mxu0 %v424
    %1759 = vmatprep.subr.mxu0 %v429
    %1760 = vmatpush1.msra.mxu0 %v428
    %1761 = vmatprep.subr.mxu0 %v433
    %1762 = vmatpush1.msra.mxu0 %v432
    %1763 = vmatprep.subr.mxu0 %v437
    %1764 = vmatpush1.msra.mxu0 %v436
    %1765 = vmatprep.subr.mxu0 %v441
    %1766 = vmatpush1.msra.mxu0 %v440
    %1767 = vmatprep.subr.mxu0 0.0
    %1768 = vmatpush1.msra.mxu0 0.0
    %1769 = vmatprep.subr.mxu0 0.0
    %1770 = vmatpush1.msra.mxu0 0.0
    %1771 = vmatprep.subr.mxu0 0.0
    %1772 = vmatpush1.msra.mxu0 0.0
    %1773 = vmatprep.subr.mxu0 0.0
    %1774 = vmatpush1.msra.mxu0 0.0
    %1775 = vmatprep.subr.mxu0 0.0
    %1776 = vmatpush1.msra.mxu0 0.0
    %1777 = vmatprep.subr.mxu0 0.0
    %1778 = vmatpush1.msra.mxu0 0.0
    %1779 = vmatprep.subr.mxu0 0.0
    %1780 = vmatpush1.msra.mxu0 0.0
    %1781 = vmatprep.subr.mxu0 0.0
    %1782 = vmatpush1.msra.mxu0 0.0
    %1783 = vmatprep.subr.mxu0 0.0
    %1784 = vmatpush1.msra.mxu0 0.0
    %1785 = vmatprep.subr.mxu0 0.0
    %1786 = vmatpush1.msra.mxu0 0.0
    %1787 = vmatprep.subr.mxu0 0.0
    %1788 = vmatpush1.msra.mxu0 0.0
    %1789 = vmatprep.subr.mxu0 0.0
    %1790 = vmatpush1.msra.mxu0 0.0
    %1791 = vmatprep.subr.mxu0 0.0
    %1792 = vmatpush1.msra.mxu0 0.0
    %1793 = vmatprep.subr.mxu0 0.0
    %1794 = vmatpush1.msra.mxu0 0.0
    %1795 = vmatprep.subr.mxu0 0.0
    %1796 = vmatpush1.msra.mxu0 0.0
    %1797 = vmatprep.subr.mxu0 0.0
    %1798 = vmatpush1.msra.mxu0 0.0
    %1799 = vmatprep.mubr.f32.mxu0 0.0
    %1800 = vmatmul.mubr.f32.gmra.mrb[0].mxu0 %v1659
    %v1801 = vpop.f32.mrb[0].mxu0
    %v1802 = vadd.f32 0.0, %v1801
    %v1803 = vpop.f32.mrb[0].mxu0
    %v1804 = vadd.f32 0.0, %v1803
    %1805 = vdwg.mxu0
    %v1806 = vadd.f32 %v1660, %v1731
    %v1807 = vadd.f32 %v1661, %v1733
    %v1808 = vadd.f32 %v1662, %v1802
    %v1809 = vadd.f32 %v1663, %v1804
    %v1810 = vxor.u32 %v1806, 2147483648
    %v1811 = vxor.u32 %v1807, 2147483648
    %v1812 = vxor.u32 %v1808, 2147483648
    %v1813 = vmul.f32 %v1810, 1.442695
    %v1814 = vpow.pop %v1813
    %v1815 = vmul.f32 %v1811, 1.442695
    %v1816 = vpow.pop %v1815
    %v1817 = vmul.f32 %v1812, 1.442695
    %v1818 = vpow.pop %v1817
    %v1819 = vadd.f32 %v1814, 1.0
    %v1820 = vadd.f32 %v1816, 1.0
    %v1821 = vadd.f32 %v1818, 1.0
    %v1822 = vrcp.pop %v1819
    %v1823 = vmul.f32 1.0, %v1822
    %v1824 = vrcp.pop %v1820
    %v1825 = vmul.f32 1.0, %v1824
    %v1826 = vrcp.pop %v1821
    %v1827 = vmul.f32 1.0, %v1826
    %v1828 = vtanh.pop %v1809
    %v1829 = vmul.f32 %v1825, %v1657
    %v1830 = vmul.f32 %v1823, %v1828
    %v1831 = vadd.f32 %v1829, %v1830
    %v1832 = vtanh.pop %v1831
    %v1833 = vmul.f32 %v1827, %v1832
    %v1834 = vld [vmem:[%s1] sm:$0xff]
    %v1835 = vlaneseq
    %v1836 = vand.u32 %v1835, 127
    %v1837 = vcvt.s32.f32 %v1836
    %vm1838 = vcmask 130048
    %v1839 = vsel %vm1838, %v1834, -inf
    %1840 = vmax.xlane.f32.xlu0 %v1839
    %v1841 = vpop.xlane.xlu0 %1840
    %vm1842 = vcmp.eq.f32.partialorder %v1834, %v1841
    %v1843 = vsel %vm1842, %v1837, 16.0
    %v1844 = vsel %vm1838, %v1843, inf
    %1845 = vmin.xlane.f32.xlu0 %v1844
    %v1846 = vpop.xlane.xlu0 %1845
    %vm1847 = vcmp.eq.f32.partialorder %v1837, %v1846
    %v1848 = vsel %vm1847, 1, 0
    %v1849 = vcvt.s32.f32 %v1848
    %v1850 = vld [vmem:[#allocation6] sm:$0xff]
    %v1851 = vld [vmem:[#allocation6 + $0x8] sm:$0xff]
    %v1852 = vld [vmem:[#allocation6 + $0x10] sm:$0xff]
    %v1853 = vld [vmem:[#allocation6 + $0x18] sm:$0xff]
    %v1854 = vld [vmem:[#allocation6 + $0x20] sm:$0xff]
    %v1855 = vld [vmem:[#allocation6 + $0x28] sm:$0xff]
    %v1856 = vld [vmem:[#allocation6 + $0x30] sm:$0xff]
    %v1857 = vld [vmem:[#allocation6 + $0x38] sm:$0xff]
    %v1858 = vld [vmem:[#allocation6 + $0x40] sm:$0xff]
    %v1859 = vld [vmem:[#allocation6 + $0x48] sm:$0xff]
    %v1860 = vld [vmem:[#allocation6 + $0x50] sm:$0xff]
    %v1861 = vld [vmem:[#allocation6 + $0x58] sm:$0xff]
    %v1862 = vld [vmem:[#allocation6 + $0x60] sm:$0xff]
    %v1863 = vld [vmem:[#allocation6 + $0x68] sm:$0xff]
    %v1864 = vld [vmem:[#allocation6 + $0x70] sm:$0xff]
    %v1865 = vld [vmem:[#allocation6 + $0x78] sm:$0xff]
    %v1866 = vld [vmem:[#allocation6 + $0x80] sm:$0xff]
    %v1867 = vld [vmem:[#allocation6 + $0x88] sm:$0xff]
    %v1869 = vsel %vm1838, %v1849, 0
    %1871 = vmatprep.subr.mxu0 0.0
    %1872 = vmatpush1.msra.mxu0 %v1866
    %1873 = vmatprep.subr.mxu0 0.0
    %1874 = vmatpush1.msra.mxu0 %v1867
    %1875 = vmatprep.subr.mxu0 0.0
    %1876 = vmatpush1.msra.mxu0 0.0
    %1877 = vmatprep.subr.mxu0 0.0
    %1878 = vmatpush1.msra.mxu0 0.0
    %1879 = vmatprep.subr.mxu0 0.0
    %1880 = vmatpush1.msra.mxu0 0.0
    %1881 = vmatprep.subr.mxu0 0.0
    %1882 = vmatpush1.msra.mxu0 0.0
    %1883 = vmatprep.subr.mxu0 0.0
    %1884 = vmatpush1.msra.mxu0 0.0
    %1885 = vmatprep.subr.mxu0 0.0
    %1886 = vmatpush1.msra.mxu0 0.0
    %1887 = vmatprep.subr.mxu0 0.0
    %1888 = vmatpush1.msra.mxu0 0.0
    %1889 = vmatprep.subr.mxu0 0.0
    %1890 = vmatpush1.msra.mxu0 0.0
    %1891 = vmatprep.subr.mxu0 0.0
    %1892 = vmatpush1.msra.mxu0 0.0
    %1893 = vmatprep.subr.mxu0 0.0
    %1894 = vmatpush1.msra.mxu0 0.0
    %1895 = vmatprep.subr.mxu0 0.0
    %1896 = vmatpush1.msra.mxu0 0.0
    %1897 = vmatprep.subr.mxu0 0.0
    %1898 = vmatpush1.msra.mxu0 0.0
    %1899 = vmatprep.subr.mxu0 0.0
    %1900 = vmatpush1.msra.mxu0 0.0
    %1901 = vmatprep.subr.mxu0 0.0
    %1902 = vmatpush1.msra.mxu0 0.0
    %1903 = vmatprep.subr.mxu0 0.0
    %1904 = vmatpush1.msra.mxu0 0.0
    %1905 = vmatprep.subr.mxu0 0.0
    %1906 = vmatpush1.msra.mxu0 0.0
    %1907 = vmatprep.subr.mxu0 0.0
    %1908 = vmatpush1.msra.mxu0 0.0
    %1909 = vmatprep.subr.mxu0 0.0
    %1910 = vmatpush1.msra.mxu0 0.0
    %1911 = vmatprep.subr.mxu0 0.0
    %1912 = vmatpush1.msra.mxu0 0.0
    %1913 = vmatprep.subr.mxu0 0.0
    %1914 = vmatpush1.msra.mxu0 0.0
    %1915 = vmatprep.subr.mxu0 0.0
    %1916 = vmatpush1.msra.mxu0 0.0
    %1917 = vmatprep.subr.mxu0 0.0
    %1918 = vmatpush1.msra.mxu0 0.0
    %1919 = vmatprep.subr.mxu0 0.0
    %1920 = vmatpush1.msra.mxu0 0.0
    %1921 = vmatprep.subr.mxu0 0.0
    %1922 = vmatpush1.msra.mxu0 0.0
    %1923 = vmatprep.subr.mxu0 0.0
    %1924 = vmatpush1.msra.mxu0 0.0
    %1925 = vmatprep.subr.mxu0 0.0
    %1926 = vmatpush1.msra.mxu0 0.0
    %1927 = vmatprep.subr.mxu0 0.0
    %1928 = vmatpush1.msra.mxu0 0.0
    %1929 = vmatprep.subr.mxu0 0.0
    %1930 = vmatpush1.msra.mxu0 0.0
    %1931 = vmatprep.subr.mxu0 0.0
    %1932 = vmatpush1.msra.mxu0 0.0
    %1933 = vmatprep.subr.mxu0 0.0
    %1934 = vmatpush1.msra.mxu0 0.0
    %1935 = vmatprep.mubr.f32.mxu0 0.0
    %1936 = vmatmul.mubr.f32.gmra.mrb[0].mxu0 %v1869
    %v1937 = vpop.f32.mrb[0].mxu0
    %v1938 = vadd.f32 0.0, %v1937
    %v1939 = vpop.f32.mrb[0].mxu0
    %1940 = vdwg.mxu0
    %1941 = vmatprep.subr.mxu0 0.0
    %1942 = vmatpush1.msra.mxu0 %v1850
    %1943 = vmatprep.subr.mxu0 0.0
    %1944 = vmatpush1.msra.mxu0 %v1851
    %1945 = vmatprep.subr.mxu0 0.0
    %1946 = vmatpush1.msra.mxu0 %v1852
    %1947 = vmatprep.subr.mxu0 0.0
    %1948 = vmatpush1.msra.mxu0 %v1853
    %1949 = vmatprep.subr.mxu0 0.0
    %1950 = vmatpush1.msra.mxu0 %v1854
    %1951 = vmatprep.subr.mxu0 0.0
    %1952 = vmatpush1.msra.mxu0 %v1855
    %1953 = vmatprep.subr.mxu0 0.0
    %1954 = vmatpush1.msra.mxu0 %v1856
    %1955 = vmatprep.subr.mxu0 0.0
    %1956 = vmatpush1.msra.mxu0 %v1857
    %1957 = vmatprep.subr.mxu0 0.0
    %1958 = vmatpush1.msra.mxu0 %v1858
    %1959 = vmatprep.subr.mxu0 0.0
    %1960 = vmatpush1.msra.mxu0 %v1859
    %1961 = vmatprep.subr.mxu0 0.0
    %1962 = vmatpush1.msra.mxu0 %v1860
    %1963 = vmatprep.subr.mxu0 0.0
    %1964 = vmatpush1.msra.mxu0 %v1861
    %1965 = vmatprep.subr.mxu0 0.0
    %1966 = vmatpush1.msra.mxu0 %v1862
    %1967 = vmatprep.subr.mxu0 0.0
    %1968 = vmatpush1.msra.mxu0 %v1863
    %1969 = vmatprep.subr.mxu0 0.0
    %1970 = vmatpush1.msra.mxu0 %v1864
    %1971 = vmatprep.subr.mxu0 0.0
    %1972 = vmatpush1.msra.mxu0 %v1865
    %1973 = vmatprep.subr.mxu0 0.0
    %1974 = vmatpush1.msra.mxu0 0.0
    %1975 = vmatprep.subr.mxu0 0.0
    %1976 = vmatpush1.msra.mxu0 0.0
    %1977 = vmatprep.subr.mxu0 0.0
    %1978 = vmatpush1.msra.mxu0 0.0
    %1979 = vmatprep.subr.mxu0 0.0
    %1980 = vmatpush1.msra.mxu0 0.0
    %1981 = vmatprep.subr.mxu0 0.0
    %1982 = vmatpush1.msra.mxu0 0.0
    %1983 = vmatprep.subr.mxu0 0.0
    %1984 = vmatpush1.msra.mxu0 0.0
    %1985 = vmatprep.subr.mxu0 0.0
    %1986 = vmatpush1.msra.mxu0 0.0
    %1987 = vmatprep.subr.mxu0 0.0
    %1988 = vmatpush1.msra.mxu0 0.0
    %1989 = vmatprep.subr.mxu0 0.0
    %1990 = vmatpush1.msra.mxu0 0.0
    %1991 = vmatprep.subr.mxu0 0.0
    %1992 = vmatpush1.msra.mxu0 0.0
    %1993 = vmatprep.subr.mxu0 0.0
    %1994 = vmatpush1.msra.mxu0 0.0
    %1995 = vmatprep.subr.mxu0 0.0
    %1996 = vmatpush1.msra.mxu0 0.0
    %1997 = vmatprep.subr.mxu0 0.0
    %1998 = vmatpush1.msra.mxu0 0.0
    %1999 = vmatprep.subr.mxu0 0.0
    %2000 = vmatpush1.msra.mxu0 0.0
    %2001 = vmatprep.subr.mxu0 0.0
    %2002 = vmatpush1.msra.mxu0 0.0
    %2003 = vmatprep.subr.mxu0 0.0
    %2004 = vmatpush1.msra.mxu0 0.0
    %2005 = vmatprep.mubr.f32.mxu0 0.0
    %2006 = vmatmul.mubr.f32.gmra.mrb[0].mxu0 %v1833
    %v2007 = vpop.f32.mrb[0].mxu0
    %v2008 = vadd.f32 %v1938, %v2007
    %v2009 = vpop.f32.mrb[0].mxu0
    %2010 = vdwg.mxu0
    %v2011 = vld [vmem:[%s4 + $0x4] sm:$0x1]
    %v2013 = vlaneseq
    %v2014 = vshrl.u32 %v2013, 7
    %v2015 = vsub.s32 0, %v2014
    %v2016 = vrot.slane %v2011, %v2015
    %v2018 = vadd.f32 %v2008, %v2016
    %v2019 = vtanh.pop %v2018
    %v2020 = vld [vmem:[#allocation6 + $0x90] sm:$0xff]
    %v2021 = vld [vmem:[#allocation6 + $0x98] sm:$0xff]
    %v2022 = vld [vmem:[#allocation6 + $0xa0] sm:$0xff]
    %v2023 = vld [vmem:[#allocation6 + $0xa8] sm:$0xff]
    %v2024 = vld [vmem:[#allocation6 + $0xb0] sm:$0xff]
    %v2025 = vld [vmem:[#allocation6 + $0xb8] sm:$0xff]
    %v2026 = vld [vmem:[#allocation6 + $0xc0] sm:$0xff]
    %v2027 = vld [vmem:[#allocation6 + $0xc8] sm:$0xff]
    %v2028 = vld [vmem:[#allocation6 + $0xd0] sm:$0xff]
    %v2029 = vld [vmem:[#allocation6 + $0xd8] sm:$0xff]
    %v2030 = vld [vmem:[#allocation6 + $0xe0] sm:$0xff]
    %v2031 = vld [vmem:[#allocation6 + $0xe8] sm:$0xff]
    %v2032 = vld [vmem:[#allocation6 + $0xf0] sm:$0xff]
    %v2033 = vld [vmem:[#allocation6 + $0xf8] sm:$0xff]
    %v2034 = vld [vmem:[#allocation6 + $0x100] sm:$0xff]
    %v2035 = vld [vmem:[#allocation6 + $0x108] sm:$0xff]
    %v2036 = vld [vmem:[%s4 + $0x5] sm:$0x1]
    %v2038 = vlaneseq
    %v2039 = vshrl.u32 %v2038, 7
    %v2040 = vsub.s32 0, %v2039
    %v2041 = vrot.slane %v2036, %v2040
    %2043 = vmatprep.subr.mxu0 0.0
    %2044 = vmatpush1.msra.mxu0 %v2020
    %2045 = vmatprep.subr.mxu0 0.0
    %2046 = vmatpush1.msra.mxu0 %v2021
    %2047 = vmatprep.subr.mxu0 0.0
    %2048 = vmatpush1.msra.mxu0 %v2022
    %2049 = vmatprep.subr.mxu0 0.0
    %2050 = vmatpush1.msra.mxu0 %v2023
    %2051 = vmatprep.subr.mxu0 0.0
    %2052 = vmatpush1.msra.mxu0 %v2024
    %2053 = vmatprep.subr.mxu0 0.0
    %2054 = vmatpush1.msra.mxu0 %v2025
    %2055 = vmatprep.subr.mxu0 0.0
    %2056 = vmatpush1.msra.mxu0 %v2026
    %2057 = vmatprep.subr.mxu0 0.0
    %2058 = vmatpush1.msra.mxu0 %v2027
    %2059 = vmatprep.subr.mxu0 0.0
    %2060 = vmatpush1.msra.mxu0 %v2028
    %2061 = vmatprep.subr.mxu0 0.0
    %2062 = vmatpush1.msra.mxu0 %v2029
    %2063 = vmatprep.subr.mxu0 0.0
    %2064 = vmatpush1.msra.mxu0 %v2030
    %2065 = vmatprep.subr.mxu0 0.0
    %2066 = vmatpush1.msra.mxu0 %v2031
    %2067 = vmatprep.subr.mxu0 0.0
    %2068 = vmatpush1.msra.mxu0 %v2032
    %2069 = vmatprep.subr.mxu0 0.0
    %2070 = vmatpush1.msra.mxu0 %v2033
    %2071 = vmatprep.subr.mxu0 0.0
    %2072 = vmatpush1.msra.mxu0 %v2034
    %2073 = vmatprep.subr.mxu0 0.0
    %2074 = vmatpush1.msra.mxu0 %v2035
    %2075 = vmatprep.subr.mxu0 0.0
    %2076 = vmatpush1.msra.mxu0 0.0
    %2077 = vmatprep.subr.mxu0 0.0
    %2078 = vmatpush1.msra.mxu0 0.0
    %2079 = vmatprep.subr.mxu0 0.0
    %2080 = vmatpush1.msra.mxu0 0.0
    %2081 = vmatprep.subr.mxu0 0.0
    %2082 = vmatpush1.msra.mxu0 0.0
    %2083 = vmatprep.subr.mxu0 0.0
    %2084 = vmatpush1.msra.mxu0 0.0
    %2085 = vmatprep.subr.mxu0 0.0
    %2086 = vmatpush1.msra.mxu0 0.0
    %2087 = vmatprep.subr.mxu0 0.0
    %2088 = vmatpush1.msra.mxu0 0.0
    %2089 = vmatprep.subr.mxu0 0.0
    %2090 = vmatpush1.msra.mxu0 0.0
    %2091 = vmatprep.subr.mxu0 0.0
    %2092 = vmatpush1.msra.mxu0 0.0
    %2093 = vmatprep.subr.mxu0 0.0
    %2094 = vmatpush1.msra.mxu0 0.0
    %2095 = vmatprep.subr.mxu0 0.0
    %2096 = vmatpush1.msra.mxu0 0.0
    %2097 = vmatprep.subr.mxu0 0.0
    %2098 = vmatpush1.msra.mxu0 0.0
    %2099 = vmatprep.subr.mxu0 0.0
    %2100 = vmatpush1.msra.mxu0 0.0
    %2101 = vmatprep.subr.mxu0 0.0
    %2102 = vmatpush1.msra.mxu0 0.0
    %2103 = vmatprep.subr.mxu0 0.0
    %2104 = vmatpush1.msra.mxu0 0.0
    %2105 = vmatprep.subr.mxu0 0.0
    %2106 = vmatpush1.msra.mxu0 0.0
    %2107 = vmatprep.mubr.f32.mxu0 0.0
    %2108 = vmatmul.mubr.f32.gmra.mrb[0].mxu0 %v2019
    %v2109 = vpop.f32.mrb[0].mxu0
    %v2110 = vadd.f32 %v2041, %v2109
    %v2111 = vpop.f32.mrb[0].mxu0
    %2112 = vdwg.mxu0
    %v2113 = vtanh.pop %v2110
    %2114 = vst [vmem:[#allocation8] sm:$0xff] %v2113
    // Predicated region
    $region30: #{tpu_custom_call.1} parent=1 // pred_check
      _
    $region31: #{tpu_custom_call.1} parent=1 // pred_check_branch
      %2116 = sbr.rel (0) target = $region33
    $region32: #{tpu_custom_call.1} parent=1 // pred_region
      %s2118 = ssub.s32 128, 128
      %2119 = vsyncadd [#allocation5], %s2118
      %s2121 = sshll.u32 [#allocation8], 4
      %s2122 = int_to_ptr.vmem [resolvable:$true] %s2121
      %2124 = dma.vmem_to_hbm [thread:$0]  %s2122, 128, %s5, [#allocation5]
    $region33: #{tpu_custom_call.1} parent=1 // pred_fallthru
      _
    // Predicated region
    $region34: #{tpu_custom_call.1} parent=1 // pred_check
      _
    $region35: #{tpu_custom_call.1} parent=1 // pred_check_branch
      %2126 = sbr.rel (0) target = $region37
    $region36: #{tpu_custom_call.1} parent=1 // pred_region
      %2127 = dma.done [#allocation5], 128
    $region37: #{tpu_custom_call.1} parent=1 // pred_fallthru
      _
    %2128 = vsyncpa [#allocation4], 1
    %2129 = vsyncpa [#allocation7], 1
    %2130 = vsyncpa [#allocation5], 1

</llo_original>
